<compile_context>
chip_gen: v7x
topology: tpu7x:2x2x1
jax: 0.10.0
libtpu: 0.0.40
codegen_flags: <defaults>
</compile_context>

<pallas_src>
import functools

import jax
import jax.numpy as jnp
from jax import lax
from jax.experimental import pallas as pl
from jax.experimental.pallas import tpu as pltpu


def _softmax_lane(z, approx):
    """Softmax over the last (lane) axis; denominator reciprocal on the EUP."""
    m = jnp.max(z, axis=-1, keepdims=True)
    e = jnp.exp(z - m)
    return e * pl.reciprocal(jnp.sum(e, axis=-1, keepdims=True), approx=approx)


def _coil_kernel(x_ref, w_hbm, out_ref, tfin_ref, w_vmem, w_sem, *,
                 sel_temp, norm_temp):
    """Grid step = one (batch block, TL-timestep chunk).

    x_ref    : (TL, BB, F)          input states for this chunk
    w_hbm    : (F*F, F*(F+1)) HBM   flattened interaction tensor (pl.ANY)
    out_ref  : (TL, BB, F)          output states for this chunk
    tfin_ref : (BB, F*F)            resident carry == final transition (flat i*F+j)
    w_vmem   : (F*F, F*(F+1)) VMEM  single-buffered weight copy
    w_sem    : DMA semaphore
    """
    TL = x_ref.shape[0]
    BB = x_ref.shape[1]
    F = x_ref.shape[2]
    inv_sel = 1.0 / sel_temp

    l_blk = pl.program_id(1)

    @pl.when(l_blk == 0)
    def _init():
        # One-shot weight DMA (HBM -> single-buffered VMEM) + carry init.
        # Re-done at the start of every batch block so each TensorCore is
        # self-contained when the batch axis is megacore-split on v7x.
        cp = pltpu.make_async_copy(w_hbm, w_vmem, w_sem)
        cp.start()
        cp.wait()
        # starting_transition_tensor = softmax(zeros, dim=1) == uniform 1/F
        tfin_ref[...] = jnp.full((BB, F * F), 1.0 / F, dtype=jnp.float32)

    # Single VMEM-resident copy of W feeds both MXU matmuls.
    # TODO(synk): for large F on v7x (64 MiB VMEM) store W as bf16 and/or tile
    # it along k with an extra "arbitrary" grid axis.
    W = w_vmem[...]                                        # (F*F, F*(F+1)) f32

    # Constant chunk-sum matrix R[i*F+j, i] = 1 (sums contiguous groups of F
    # lanes).  Built once per grid step from 2-D iota (no dense constants, no
    # div/mod), hoisted out of the timestep loop.
    rows = lax.broadcasted_iota(jnp.int32, (F * F, F), 0)
    cols = lax.broadcasted_iota(jnp.int32, (F * F, F), 1)
    R = ((rows >= cols * F) & (rows < (cols + 1) * F)).astype(jnp.float32)

    def step(t, T_flat):
        # T_flat : (BB, F*F) transition carry, flat index i*F+j, kept in vregs.
        s = x_ref[t].astype(jnp.float32)                   # (BB, F)   state

        # Feature-selection softmaxes.  Approx reciprocal is safe here: its
        # error is a uniform per-batch scale on low/high, hence a uniform
        # scale on all selection logits -> cannot flip the 1e-3-temperature
        # selection.
        zs = s * inv_sel
        high = _softmax_lane(zs, approx=True)              # softmax(s/temp)
        low = _softmax_lane(-zs, approx=True)              # == softmax(1 - s/temp)

        # LH[b, i*F+j] = low[b,i] * high[b,j]  (flat outer product, static lane concat)
        lh = jnp.concatenate([low[:, i:i + 1] * high for i in range(F)], axis=1)

        # G[b, m*(F+1)+k] = sum_{i,j} LH[b, ij] * W[ij, mk]            -- MXU #1
        G = jnp.dot(lh, W, preferred_element_type=jnp.float32)         # (BB, F*(F+1))

        # N[b, m*(F+1)+k]: k == 0 -> state[m], k >= 1 -> transition[m, k-1].
        # Built from contiguous lane slices of the flat carry (no reshapes).
        n_parts = []
        for m in range(F):
            n_parts.append(s[:, m:m + 1])
            n_parts.append(T_flat[:, m * F:(m + 1) * F])
        N = jnp.concatenate(n_parts, axis=1)                           # (BB, F*(F+1))

        # logits[b, k] = sum_m N[b,m,k] * G[b,m,k]  (cross-chunk adds; no
        # width-1 lane concatenation).
        NG = N * G
        logits = NG[:, 0:F + 1]
        for m in range(1, F):
            logits = logits + NG[:, m * (F + 1):(m + 1) * (F + 1)]
        # Exact denominator here: wsel errors rescale the selected transition
        # like a temperature change that feeds the carried state through the
        # 1/sel_temp-amplified path of the next step.
        wsel = _softmax_lane(logits * inv_sel, approx=False)           # (BB, F+1)

        # sel[b, i*F+j] = sum_{m,k} W[ij, mk] * N[b, mk] * wsel[b, k]  -- MXU #2
        A = N * jnp.concatenate([wsel] * F, axis=1)                    # wsel broadcast (k fast)
        sel = lax.dot_general(
            A, W,
            dimension_numbers=(((1,), (1,)), ((), ())),                # A @ W^T
            preferred_element_type=jnp.float32)                        # (BB, F*F)

        # softmax over rows i (per column j), chunked over i in the flat
        # layout (cross-chunk max / sum over lanes = j).  Exact denominator:
        # this result is the recurrence carry.
        z = sel * norm_temp
        zc = [z[:, i * F:(i + 1) * F] for i in range(F)]
        cmax = zc[0]
        for i in range(1, F):
            cmax = jnp.maximum(cmax, zc[i])
        ec = [jnp.exp(c - cmax) for c in zc]
        denom = ec[0]
        for i in range(1, F):
            denom = denom + ec[i]
        inv_d = pl.reciprocal(denom, approx=False)                     # (BB, F)
        sel_sm = jnp.concatenate([e * inv_d for e in ec], axis=1)      # (BB, F*F)

        # new_state[b, i] = sum_j sel_sm[b, i*F+j] * s[b, j]           -- MXU #3
        P = sel_sm * jnp.concatenate([s] * F, axis=1)                  # s broadcast (j fast)
        new_state = jnp.dot(P, R, preferred_element_type=jnp.float32)  # (BB, F)

        out_ref[t] = new_state.astype(out_ref.dtype)
        return sel_sm                                                  # next-step carry (vregs)

    # Read the resident carry once, run TL steps with the carry in registers,
    # flush the resident block once.
    T_last = lax.fori_loop(0, TL, step, tfin_ref[...], unroll=TL <= 8)
    tfin_ref[...] = T_last


def neural_coil_forward(x, interaction, *, sel_temp=0.001, norm_temp=7.0,
                        block_l=None, block_b=None):
    """x: (B, L, F) float32 (PyTorch convention).  Returns (output, final_transition)."""
    B, L, F = x.shape
    assert interaction.shape == (F, F, F, F + 1)

    if block_l is None:
        block_l = min(L, 8)
    assert L % block_l == 0, "block_l must divide L"
    if block_b is None:
        block_b = B          # split (multiple of 8, or B) only when targeting v7x megacore
    assert B % block_b == 0 and (block_b == B or block_b % 8 == 0)

    nb, nl = B // block_b, L // block_l

    # Layout plumbing in the wrapper (free):
    #  - time-major activations
    #  - lane-dense flattened weights W[(i*F+j), (m*(F+1)+k)]
    x_t = jnp.transpose(x, (1, 0, 2))                                   # (L, B, F)
    w_mat = interaction.astype(jnp.float32).reshape(F * F, F * (F + 1))

    kernel = functools.partial(
        _coil_kernel, sel_temp=float(sel_temp), norm_temp=float(norm_temp))

    out_t, tfin_flat = pl.pallas_call(
        kernel,
        out_shape=(
            jax.ShapeDtypeStruct((L, B, F), x.dtype),
            jax.ShapeDtypeStruct((B, F * F), jnp.float32),
        ),
        grid_spec=pltpu.PrefetchScalarGridSpec(
            num_scalar_prefetch=0,
            grid=(nb, nl),                                   # (batch blocks, time blocks)
            in_specs=[
                pl.BlockSpec((block_l, block_b, F), lambda b, l: (l, b, 0)),
                pl.BlockSpec(memory_space=pl.ANY),           # weights stay in HBM
            ],
            out_specs=[
                pl.BlockSpec((block_l, block_b, F), lambda b, l: (l, b, 0)),
                pl.BlockSpec((block_b, F * F), lambda b, l: (b, 0)),   # resident carry
            ],
            scratch_shapes=[
                pltpu.VMEM((F * F, F * (F + 1)), jnp.float32),  # single-buffered W
                pltpu.SemaphoreType.DMA(()),
            ],
        ),
        compiler_params=pltpu.CompilerParams(
            dimension_semantics=("parallel", "arbitrary"),
            vmem_limit_bytes=64 * 1024 * 1024,
        ),
    )(x_t, w_mat)

    out = jnp.transpose(out_t, (1, 0, 2))                               # back to (B, L, F)
    t_final = tfin_flat.reshape(B, F, F)
    return out, t_final


def _reference(x, W, sel_temp, norm_temp):
    """Pure-JAX transliteration of the PyTorch module for verification."""
    B, L, F = x.shape
    T = jnp.full((B, F, F), 1.0 / F, jnp.float32)   # softmax of zeros over dim 1
    outs = []
    for l in range(L):
        s = x[:, l, :]
        N = jnp.concatenate([s[:, :, None], T], axis=2)                 # (B, F, F+1)
        C = jnp.sum(W[None] * N[:, None, None, :, :], axis=-2)          # (B, F, F, F+1)
        high = jax.nn.softmax(s / sel_temp, axis=1)
        low = jax.nn.softmax(1.0 - s / sel_temp, axis=1)
        focus = C * high[:, None, :, None] * low[:, :, None, None]
        wsel = jax.nn.softmax(focus.sum(2).sum(1) / sel_temp, axis=1)   # (B, F+1)
        sel = jnp.sum(C * wsel[:, None, None, :], axis=-1)              # (B, F, F)
        sel = jax.nn.softmax(sel * norm_temp, axis=1)
        new_state = jnp.sum(sel * s[:, None, :], axis=-1)               # (B, F)
        outs.append(new_state)
        T = sel
    return jnp.stack(outs, axis=1), T


if __name__ == "__main__":
    B, L, F = 2, 8, 4  # n_batch=2, seq length=8, n_features=4
    key = jax.random.PRNGKey(0)
    k_x, k_w = jax.random.split(key)

    x = jax.random.normal(k_x, (B, L, F), dtype=jnp.float32)
    # interaction_tensors ~ torch.rand(F, F, F, F+1): uniform [0, 1)
    interaction = jax.random.uniform(k_w, (F, F, F, F + 1), dtype=jnp.float32)

    # block_l=4 -> 2 time blocks: exercises the resident cross-grid-step carry.
    out, t_final = neural_coil_forward(x, interaction, sel_temp=0.001,
                                       norm_temp=7.0, block_l=4)
    jax.block_until_ready((out, t_final))

    ref_out, ref_t = _reference(x, interaction, 0.001, 7.0)
    assert out.shape == (B, L, F) and t_final.shape == (B, F, F)
    assert jnp.allclose(out, ref_out, rtol=2e-2, atol=1e-2), \
        float(jnp.max(jnp.abs(out - ref_out)))
    assert jnp.allclose(t_final, ref_t, rtol=2e-2, atol=1e-2), \
        float(jnp.max(jnp.abs(t_final - ref_t)))

    print("KERNEL_OK")
</pallas_src>

<mosaic_0001>
module attributes {stable_mosaic.version = 11 : i64} {
  func.func @_coil_kernel(%arg0: i32, %arg1: i32, %arg2: memref<4x2x4xf32, #tpu.memory_space<vmem>>, %arg3: memref<16x20xf32, #tpu.memory_space<any>>, %arg4: memref<4x2x4xf32, #tpu.memory_space<vmem>>, %arg5: memref<2x16xf32, #tpu.memory_space<vmem>>, %arg6: memref<16x20xf32, #tpu.memory_space<vmem>>, %arg7: memref<!tpu.dma_semaphore, #tpu.memory_space<semaphore_mem>>) attributes {dimension_semantics = [#tpu.dimension_semantics<parallel>, #tpu.dimension_semantics<arbitrary>], iteration_bounds = array<i64: 1, 2>, scalar_prefetch = 0 : i64, scratch_operands = 2 : i64, tpu.core_type = #tpu.core_type<tc>, window_params = [{transform_indices = @transform_0, window_bounds = array<i64: 4, 2, 4>}, {}, {transform_indices = @transform_2, window_bounds = array<i64: 4, 2, 4>}, {transform_indices = @transform_3, window_bounds = array<i64: 2, 16>}]} {
    %c0_i32 = arith.constant 0 : i32
    %0 = arith.cmpi eq, %arg1, %c0_i32 : i32
    %1 = arith.extui %0 : i1 to i32
    %c0_i32_0 = arith.constant 0 : i32
    %2 = arith.cmpi ne, %1, %c0_i32_0 : i32
    scf.if %2 {
      tpu.enqueue_dma source(%arg3 : memref<16x20xf32, #tpu.memory_space<any>>) target(%arg6 : memref<16x20xf32, #tpu.memory_space<vmem>>) target_semaphore(%arg7 : memref<!tpu.dma_semaphore, #tpu.memory_space<semaphore_mem>>)
      tpu.wait_dma2 semaphore(%arg7 : memref<!tpu.dma_semaphore, #tpu.memory_space<semaphore_mem>>) src(%arg3 : memref<16x20xf32, #tpu.memory_space<any>>) dst(%arg6 : memref<16x20xf32, #tpu.memory_space<vmem>>)
      %cst_77 = arith.constant 2.500000e-01 : f32
      %443 = vector.broadcast %cst_77 : f32 to vector<2x16xf32>
      %c0_78 = arith.constant 0 : index
      %c0_79 = arith.constant 0 : index
      %444 = vector.load %arg5[%c0_78, %c0_79] : memref<2x16xf32, #tpu.memory_space<vmem>>, vector<2x16xf32>
      tpu.vector_store %arg5[%c0_78, %c0_79], %443 {strides = array<i32>} : memref<2x16xf32, #tpu.memory_space<vmem>>, vector<2x16xf32>,
    } else {
    }
    %c0 = arith.constant 0 : index
    %c0_1 = arith.constant 0 : index
    %3 = vector.load %arg6[%c0, %c0_1] : memref<16x20xf32, #tpu.memory_space<vmem>>, vector<16x20xf32>
    %4 = tpu.iota {dimensions = array<i32: 0>} : vector<16x4xi32>
    %5 = tpu.iota {dimensions = array<i32: 1>} : vector<16x4xi32>
    %c4_i32 = arith.constant 4 : i32
    %6 = vector.broadcast %c4_i32 : i32 to vector<16x4xi32>
    %7 = arith.muli %5, %6 : vector<16x4xi32>
    %8 = arith.cmpi sge, %4, %7 : vector<16x4xi32>
    %c1_i32 = arith.constant 1 : i32
    %9 = vector.broadcast %c1_i32 : i32 to vector<16x4xi32>
    %10 = arith.addi %5, %9 : vector<16x4xi32>
    %c4_i32_2 = arith.constant 4 : i32
    %11 = vector.broadcast %c4_i32_2 : i32 to vector<16x4xi32>
    %12 = arith.muli %10, %11 : vector<16x4xi32>
    %13 = arith.cmpi slt, %4, %12 : vector<16x4xi32>
    %14 = arith.andi %8, %13 : vector<16x4xi1>
    %15 = arith.extui %14 : vector<16x4xi1> to vector<16x4xi32>
    %16 = arith.sitofp %15 : vector<16x4xi32> to vector<16x4xf32>
    %c0_3 = arith.constant 0 : index
    %c0_4 = arith.constant 0 : index
    %17 = vector.load %arg5[%c0_3, %c0_4] : memref<2x16xf32, #tpu.memory_space<vmem>>, vector<2x16xf32>
    %c0_i32_5 = arith.constant 0 : i32
    %18 = arith.index_cast %c0_i32_5 : i32 to index
    %c0_6 = arith.constant 0 : index
    %c0_7 = arith.constant 0 : index
    %19 = vector.load %arg2[%18, %c0_6, %c0_7] : memref<4x2x4xf32, #tpu.memory_space<vmem>>, vector<1x2x4xf32>
    %20 = vector.shape_cast %19 : vector<1x2x4xf32> to vector<2x4xf32>
    %cst = arith.constant 1.000000e+03 : f32
    %21 = vector.broadcast %cst : f32 to vector<2x4xf32>
    %22 = arith.mulf %20, %21 : vector<2x4xf32>
    %cst_8 = arith.constant dense<0xFF800000> : vector<2xf32>
    %23 = vector.multi_reduction <maximumf>, %22, %cst_8 [1] : vector<2x4xf32> to vector<2xf32>
    %24 = vector.shape_cast %23 : vector<2xf32> to vector<2x1xf32>
    %25 = vector.broadcast %24 : vector<2x1xf32> to vector<2x4xf32>
    %26 = arith.subf %22, %25 : vector<2x4xf32>
    %27 = math.exp %26 : vector<2x4xf32>
    %cst_9 = arith.constant dense<0.000000e+00> : vector<2xf32>
    %28 = vector.multi_reduction <add>, %27, %cst_9 [1] : vector<2x4xf32> to vector<2xf32>
    %29 = vector.shape_cast %28 : vector<2xf32> to vector<2x1xf32>
    %30 = tpu.reciprocal %29 {approx = true} : vector<2x1xf32> -> vector<2x1xf32>
    %31 = vector.broadcast %30 : vector<2x1xf32> to vector<2x4xf32>
    %32 = arith.mulf %27, %31 : vector<2x4xf32>
    %cst_10 = arith.constant 0.000000e+00 : f32
    %33 = vector.broadcast %cst_10 : f32 to vector<2x4xf32>
    %34 = arith.subf %33, %22 : vector<2x4xf32>
    %cst_11 = arith.constant dense<0xFF800000> : vector<2xf32>
    %35 = vector.multi_reduction <maximumf>, %34, %cst_11 [1] : vector<2x4xf32> to vector<2xf32>
    %36 = vector.shape_cast %35 : vector<2xf32> to vector<2x1xf32>
    %37 = vector.broadcast %36 : vector<2x1xf32> to vector<2x4xf32>
    %38 = arith.subf %34, %37 : vector<2x4xf32>
    %39 = math.exp %38 : vector<2x4xf32>
    %cst_12 = arith.constant dense<0.000000e+00> : vector<2xf32>
    %40 = vector.multi_reduction <add>, %39, %cst_12 [1] : vector<2x4xf32> to vector<2xf32>
    %41 = vector.shape_cast %40 : vector<2xf32> to vector<2x1xf32>
    %42 = tpu.reciprocal %41 {approx = true} : vector<2x1xf32> -> vector<2x1xf32>
    %43 = vector.broadcast %42 : vector<2x1xf32> to vector<2x4xf32>
    %44 = arith.mulf %39, %43 : vector<2x4xf32>
    %45 = vector.extract_strided_slice %44 {offsets = [0, 0], sizes = [2, 1], strides = [1, 1]} : vector<2x4xf32> to vector<2x1xf32>
    %46 = vector.broadcast %45 : vector<2x1xf32> to vector<2x4xf32>
    %47 = arith.mulf %46, %32 : vector<2x4xf32>
    %48 = vector.extract_strided_slice %44 {offsets = [0, 1], sizes = [2, 1], strides = [1, 1]} : vector<2x4xf32> to vector<2x1xf32>
    %49 = vector.broadcast %48 : vector<2x1xf32> to vector<2x4xf32>
    %50 = arith.mulf %49, %32 : vector<2x4xf32>
    %51 = vector.extract_strided_slice %44 {offsets = [0, 2], sizes = [2, 1], strides = [1, 1]} : vector<2x4xf32> to vector<2x1xf32>
    %52 = vector.broadcast %51 : vector<2x1xf32> to vector<2x4xf32>
    %53 = arith.mulf %52, %32 : vector<2x4xf32>
    %54 = vector.extract_strided_slice %44 {offsets = [0, 3], sizes = [2, 1], strides = [1, 1]} : vector<2x4xf32> to vector<2x1xf32>
    %55 = vector.broadcast %54 : vector<2x1xf32> to vector<2x4xf32>
    %56 = arith.mulf %55, %32 : vector<2x4xf32>
    %57 = tpu.concatenate %47, %50, %53, %56 in 1 : vector<2x4xf32>, vector<2x4xf32>, vector<2x4xf32>, vector<2x4xf32> -> vector<2x16xf32>
    %cst_13 = arith.constant dense<0.000000e+00> : vector<2x20xf32>
    %58 = tpu.matmul %57, %3, %cst_13 {dimension_numbers = #tpu.dot_dimension_numbers<[1], [0], [0], [1], [0, 0, 1, 1], [], []>} : vector<2x16xf32>, vector<16x20xf32>, vector<2x20xf32> -> vector<2x20xf32>
    %59 = vector.extract_strided_slice %20 {offsets = [0, 0], sizes = [2, 1], strides = [1, 1]} : vector<2x4xf32> to vector<2x1xf32>
    %60 = vector.extract_strided_slice %17 {offsets = [0, 0], sizes = [2, 4], strides = [1, 1]} : vector<2x16xf32> to vector<2x4xf32>
    %61 = vector.extract_strided_slice %20 {offsets = [0, 1], sizes = [2, 1], strides = [1, 1]} : vector<2x4xf32> to vector<2x1xf32>
    %62 = vector.extract_strided_slice %17 {offsets = [0, 4], sizes = [2, 4], strides = [1, 1]} : vector<2x16xf32> to vector<2x4xf32>
    %63 = vector.extract_strided_slice %20 {offsets = [0, 2], sizes = [2, 1], strides = [1, 1]} : vector<2x4xf32> to vector<2x1xf32>
    %64 = vector.extract_strided_slice %17 {offsets = [0, 8], sizes = [2, 4], strides = [1, 1]} : vector<2x16xf32> to vector<2x4xf32>
    %65 = vector.extract_strided_slice %20 {offsets = [0, 3], sizes = [2, 1], strides = [1, 1]} : vector<2x4xf32> to vector<2x1xf32>
    %66 = vector.extract_strided_slice %17 {offsets = [0, 12], sizes = [2, 4], strides = [1, 1]} : vector<2x16xf32> to vector<2x4xf32>
    %67 = tpu.concatenate %59, %60, %61, %62, %63, %64, %65, %66 in 1 : vector<2x1xf32>, vector<2x4xf32>, vector<2x1xf32>, vector<2x4xf32>, vector<2x1xf32>, vector<2x4xf32>, vector<2x1xf32>, vector<2x4xf32> -> vector<2x20xf32>
    %68 = arith.mulf %67, %58 : vector<2x20xf32>
    %69 = vector.extract_strided_slice %68 {offsets = [0, 0], sizes = [2, 5], strides = [1, 1]} : vector<2x20xf32> to vector<2x5xf32>
    %70 = vector.extract_strided_slice %68 {offsets = [0, 5], sizes = [2, 5], strides = [1, 1]} : vector<2x20xf32> to vector<2x5xf32>
    %71 = arith.addf %69, %70 : vector<2x5xf32>
    %72 = vector.extract_strided_slice %68 {offsets = [0, 10], sizes = [2, 5], strides = [1, 1]} : vector<2x20xf32> to vector<2x5xf32>
    %73 = arith.addf %71, %72 : vector<2x5xf32>
    %74 = vector.extract_strided_slice %68 {offsets = [0, 15], sizes = [2, 5], strides = [1, 1]} : vector<2x20xf32> to vector<2x5xf32>
    %75 = arith.addf %73, %74 : vector<2x5xf32>
    %cst_14 = arith.constant 1.000000e+03 : f32
    %76 = vector.broadcast %cst_14 : f32 to vector<2x5xf32>
    %77 = arith.mulf %75, %76 : vector<2x5xf32>
    %cst_15 = arith.constant dense<0xFF800000> : vector<2xf32>
    %78 = vector.multi_reduction <maximumf>, %77, %cst_15 [1] : vector<2x5xf32> to vector<2xf32>
    %79 = vector.shape_cast %78 : vector<2xf32> to vector<2x1xf32>
    %80 = vector.broadcast %79 : vector<2x1xf32> to vector<2x5xf32>
    %81 = arith.subf %77, %80 : vector<2x5xf32>
    %82 = math.exp %81 : vector<2x5xf32>
    %cst_16 = arith.constant dense<0.000000e+00> : vector<2xf32>
    %83 = vector.multi_reduction <add>, %82, %cst_16 [1] : vector<2x5xf32> to vector<2xf32>
    %84 = vector.shape_cast %83 : vector<2xf32> to vector<2x1xf32>
    %85 = tpu.reciprocal %84 : vector<2x1xf32> -> vector<2x1xf32>
    %86 = vector.broadcast %85 : vector<2x1xf32> to vector<2x5xf32>
    %87 = arith.mulf %82, %86 : vector<2x5xf32>
    %88 = tpu.concatenate %87, %87, %87, %87 in 1 : vector<2x5xf32>, vector<2x5xf32>, vector<2x5xf32>, vector<2x5xf32> -> vector<2x20xf32>
    %89 = arith.mulf %67, %88 : vector<2x20xf32>
    %cst_17 = arith.constant dense<0.000000e+00> : vector<2x16xf32>
    %90 = tpu.matmul %89, %3, %cst_17 {dimension_numbers = #tpu.dot_dimension_numbers<[1], [1], [0], [0], [0, 0, 1, 0], [], []>} : vector<2x20xf32>, vector<16x20xf32>, vector<2x16xf32> -> vector<2x16xf32>
    %cst_18 = arith.constant 7.000000e+00 : f32
    %91 = vector.broadcast %cst_18 : f32 to vector<2x16xf32>
    %92 = arith.mulf %90, %91 : vector<2x16xf32>
    %93 = vector.extract_strided_slice %92 {offsets = [0, 0], sizes = [2, 4], strides = [1, 1]} : vector<2x16xf32> to vector<2x4xf32>
    %94 = vector.extract_strided_slice %92 {offsets = [0, 4], sizes = [2, 4], strides = [1, 1]} : vector<2x16xf32> to vector<2x4xf32>
    %95 = vector.extract_strided_slice %92 {offsets = [0, 8], sizes = [2, 4], strides = [1, 1]} : vector<2x16xf32> to vector<2x4xf32>
    %96 = vector.extract_strided_slice %92 {offsets = [0, 12], sizes = [2, 4], strides = [1, 1]} : vector<2x16xf32> to vector<2x4xf32>
    %97 = arith.maximumf %93, %94 : vector<2x4xf32>
    %98 = arith.maximumf %97, %95 : vector<2x4xf32>
    %99 = arith.maximumf %98, %96 : vector<2x4xf32>
    %100 = arith.subf %93, %99 : vector<2x4xf32>
    %101 = math.exp %100 : vector<2x4xf32>
    %102 = arith.subf %94, %99 : vector<2x4xf32>
    %103 = math.exp %102 : vector<2x4xf32>
    %104 = arith.subf %95, %99 : vector<2x4xf32>
    %105 = math.exp %104 : vector<2x4xf32>
    %106 = arith.subf %96, %99 : vector<2x4xf32>
    %107 = math.exp %106 : vector<2x4xf32>
    %108 = arith.addf %101, %103 : vector<2x4xf32>
    %109 = arith.addf %108, %105 : vector<2x4xf32>
    %110 = arith.addf %109, %107 : vector<2x4xf32>
    %111 = tpu.reciprocal %110 : vector<2x4xf32> -> vector<2x4xf32>
    %112 = arith.mulf %101, %111 : vector<2x4xf32>
    %113 = arith.mulf %103, %111 : vector<2x4xf32>
    %114 = arith.mulf %105, %111 : vector<2x4xf32>
    %115 = arith.mulf %107, %111 : vector<2x4xf32>
    %116 = tpu.concatenate %112, %113, %114, %115 in 1 : vector<2x4xf32>, vector<2x4xf32>, vector<2x4xf32>, vector<2x4xf32> -> vector<2x16xf32>
    %117 = tpu.concatenate %20, %20, %20, %20 in 1 : vector<2x4xf32>, vector<2x4xf32>, vector<2x4xf32>, vector<2x4xf32> -> vector<2x16xf32>
    %118 = arith.mulf %116, %117 : vector<2x16xf32>
    %cst_19 = arith.constant dense<0.000000e+00> : vector<2x4xf32>
    %119 = tpu.matmul %118, %16, %cst_19 {dimension_numbers = #tpu.dot_dimension_numbers<[1], [0], [0], [1], [0, 0, 1, 1], [], []>} : vector<2x16xf32>, vector<16x4xf32>, vector<2x4xf32> -> vector<2x4xf32>
    %120 = arith.index_cast %c0_i32_5 : i32 to index
    %c0_20 = arith.constant 0 : index
    %c0_21 = arith.constant 0 : index
    %121 = vector.load %arg4[%120, %c0_20, %c0_21] : memref<4x2x4xf32, #tpu.memory_space<vmem>>, vector<1x2x4xf32>
    %122 = vector.shape_cast %121 : vector<1x2x4xf32> to vector<2x4xf32>
    %123 = vector.shape_cast %119 : vector<2x4xf32> to vector<1x2x4xf32>
    tpu.vector_store %arg4[%120, %c0_20, %c0_21], %123 {strides = array<i32>} : memref<4x2x4xf32, #tpu.memory_space<vmem>>, vector<1x2x4xf32>,
    %c1_i32_22 = arith.constant 1 : i32
    %124 = arith.index_cast %c1_i32_22 : i32 to index
    %c0_23 = arith.constant 0 : index
    %c0_24 = arith.constant 0 : index
    %125 = vector.load %arg2[%124, %c0_23, %c0_24] : memref<4x2x4xf32, #tpu.memory_space<vmem>>, vector<1x2x4xf32>
    %126 = vector.shape_cast %125 : vector<1x2x4xf32> to vector<2x4xf32>
    %cst_25 = arith.constant 1.000000e+03 : f32
    %127 = vector.broadcast %cst_25 : f32 to vector<2x4xf32>
    %128 = arith.mulf %126, %127 : vector<2x4xf32>
    %cst_26 = arith.constant dense<0xFF800000> : vector<2xf32>
    %129 = vector.multi_reduction <maximumf>, %128, %cst_26 [1] : vector<2x4xf32> to vector<2xf32>
    %130 = vector.shape_cast %129 : vector<2xf32> to vector<2x1xf32>
    %131 = vector.broadcast %130 : vector<2x1xf32> to vector<2x4xf32>
    %132 = arith.subf %128, %131 : vector<2x4xf32>
    %133 = math.exp %132 : vector<2x4xf32>
    %cst_27 = arith.constant dense<0.000000e+00> : vector<2xf32>
    %134 = vector.multi_reduction <add>, %133, %cst_27 [1] : vector<2x4xf32> to vector<2xf32>
    %135 = vector.shape_cast %134 : vector<2xf32> to vector<2x1xf32>
    %136 = tpu.reciprocal %135 {approx = true} : vector<2x1xf32> -> vector<2x1xf32>
    %137 = vector.broadcast %136 : vector<2x1xf32> to vector<2x4xf32>
    %138 = arith.mulf %133, %137 : vector<2x4xf32>
    %cst_28 = arith.constant 0.000000e+00 : f32
    %139 = vector.broadcast %cst_28 : f32 to vector<2x4xf32>
    %140 = arith.subf %139, %128 : vector<2x4xf32>
    %cst_29 = arith.constant dense<0xFF800000> : vector<2xf32>
    %141 = vector.multi_reduction <maximumf>, %140, %cst_29 [1] : vector<2x4xf32> to vector<2xf32>
    %142 = vector.shape_cast %141 : vector<2xf32> to vector<2x1xf32>
    %143 = vector.broadcast %142 : vector<2x1xf32> to vector<2x4xf32>
    %144 = arith.subf %140, %143 : vector<2x4xf32>
    %145 = math.exp %144 : vector<2x4xf32>
    %cst_30 = arith.constant dense<0.000000e+00> : vector<2xf32>
    %146 = vector.multi_reduction <add>, %145, %cst_30 [1] : vector<2x4xf32> to vector<2xf32>
    %147 = vector.shape_cast %146 : vector<2xf32> to vector<2x1xf32>
    %148 = tpu.reciprocal %147 {approx = true} : vector<2x1xf32> -> vector<2x1xf32>
    %149 = vector.broadcast %148 : vector<2x1xf32> to vector<2x4xf32>
    %150 = arith.mulf %145, %149 : vector<2x4xf32>
    %151 = vector.extract_strided_slice %150 {offsets = [0, 0], sizes = [2, 1], strides = [1, 1]} : vector<2x4xf32> to vector<2x1xf32>
    %152 = vector.broadcast %151 : vector<2x1xf32> to vector<2x4xf32>
    %153 = arith.mulf %152, %138 : vector<2x4xf32>
    %154 = vector.extract_strided_slice %150 {offsets = [0, 1], sizes = [2, 1], strides = [1, 1]} : vector<2x4xf32> to vector<2x1xf32>
    %155 = vector.broadcast %154 : vector<2x1xf32> to vector<2x4xf32>
    %156 = arith.mulf %155, %138 : vector<2x4xf32>
    %157 = vector.extract_strided_slice %150 {offsets = [0, 2], sizes = [2, 1], strides = [1, 1]} : vector<2x4xf32> to vector<2x1xf32>
    %158 = vector.broadcast %157 : vector<2x1xf32> to vector<2x4xf32>
    %159 = arith.mulf %158, %138 : vector<2x4xf32>
    %160 = vector.extract_strided_slice %150 {offsets = [0, 3], sizes = [2, 1], strides = [1, 1]} : vector<2x4xf32> to vector<2x1xf32>
    %161 = vector.broadcast %160 : vector<2x1xf32> to vector<2x4xf32>
    %162 = arith.mulf %161, %138 : vector<2x4xf32>
    %163 = tpu.concatenate %153, %156, %159, %162 in 1 : vector<2x4xf32>, vector<2x4xf32>, vector<2x4xf32>, vector<2x4xf32> -> vector<2x16xf32>
    %cst_31 = arith.constant dense<0.000000e+00> : vector<2x20xf32>
    %164 = tpu.matmul %163, %3, %cst_31 {dimension_numbers = #tpu.dot_dimension_numbers<[1], [0], [0], [1], [0, 0, 1, 1], [], []>} : vector<2x16xf32>, vector<16x20xf32>, vector<2x20xf32> -> vector<2x20xf32>
    %165 = vector.extract_strided_slice %126 {offsets = [0, 0], sizes = [2, 1], strides = [1, 1]} : vector<2x4xf32> to vector<2x1xf32>
    %166 = vector.extract_strided_slice %116 {offsets = [0, 0], sizes = [2, 4], strides = [1, 1]} : vector<2x16xf32> to vector<2x4xf32>
    %167 = vector.extract_strided_slice %126 {offsets = [0, 1], sizes = [2, 1], strides = [1, 1]} : vector<2x4xf32> to vector<2x1xf32>
    %168 = vector.extract_strided_slice %116 {offsets = [0, 4], sizes = [2, 4], strides = [1, 1]} : vector<2x16xf32> to vector<2x4xf32>
    %169 = vector.extract_strided_slice %126 {offsets = [0, 2], sizes = [2, 1], strides = [1, 1]} : vector<2x4xf32> to vector<2x1xf32>
    %170 = vector.extract_strided_slice %116 {offsets = [0, 8], sizes = [2, 4], strides = [1, 1]} : vector<2x16xf32> to vector<2x4xf32>
    %171 = vector.extract_strided_slice %126 {offsets = [0, 3], sizes = [2, 1], strides = [1, 1]} : vector<2x4xf32> to vector<2x1xf32>
    %172 = vector.extract_strided_slice %116 {offsets = [0, 12], sizes = [2, 4], strides = [1, 1]} : vector<2x16xf32> to vector<2x4xf32>
    %173 = tpu.concatenate %165, %166, %167, %168, %169, %170, %171, %172 in 1 : vector<2x1xf32>, vector<2x4xf32>, vector<2x1xf32>, vector<2x4xf32>, vector<2x1xf32>, vector<2x4xf32>, vector<2x1xf32>, vector<2x4xf32> -> vector<2x20xf32>
    %174 = arith.mulf %173, %164 : vector<2x20xf32>
    %175 = vector.extract_strided_slice %174 {offsets = [0, 0], sizes = [2, 5], strides = [1, 1]} : vector<2x20xf32> to vector<2x5xf32>
    %176 = vector.extract_strided_slice %174 {offsets = [0, 5], sizes = [2, 5], strides = [1, 1]} : vector<2x20xf32> to vector<2x5xf32>
    %177 = arith.addf %175, %176 : vector<2x5xf32>
    %178 = vector.extract_strided_slice %174 {offsets = [0, 10], sizes = [2, 5], strides = [1, 1]} : vector<2x20xf32> to vector<2x5xf32>
    %179 = arith.addf %177, %178 : vector<2x5xf32>
    %180 = vector.extract_strided_slice %174 {offsets = [0, 15], sizes = [2, 5], strides = [1, 1]} : vector<2x20xf32> to vector<2x5xf32>
    %181 = arith.addf %179, %180 : vector<2x5xf32>
    %cst_32 = arith.constant 1.000000e+03 : f32
    %182 = vector.broadcast %cst_32 : f32 to vector<2x5xf32>
    %183 = arith.mulf %181, %182 : vector<2x5xf32>
    %cst_33 = arith.constant dense<0xFF800000> : vector<2xf32>
    %184 = vector.multi_reduction <maximumf>, %183, %cst_33 [1] : vector<2x5xf32> to vector<2xf32>
    %185 = vector.shape_cast %184 : vector<2xf32> to vector<2x1xf32>
    %186 = vector.broadcast %185 : vector<2x1xf32> to vector<2x5xf32>
    %187 = arith.subf %183, %186 : vector<2x5xf32>
    %188 = math.exp %187 : vector<2x5xf32>
    %cst_34 = arith.constant dense<0.000000e+00> : vector<2xf32>
    %189 = vector.multi_reduction <add>, %188, %cst_34 [1] : vector<2x5xf32> to vector<2xf32>
    %190 = vector.shape_cast %189 : vector<2xf32> to vector<2x1xf32>
    %191 = tpu.reciprocal %190 : vector<2x1xf32> -> vector<2x1xf32>
    %192 = vector.broadcast %191 : vector<2x1xf32> to vector<2x5xf32>
    %193 = arith.mulf %188, %192 : vector<2x5xf32>
    %194 = tpu.concatenate %193, %193, %193, %193 in 1 : vector<2x5xf32>, vector<2x5xf32>, vector<2x5xf32>, vector<2x5xf32> -> vector<2x20xf32>
    %195 = arith.mulf %173, %194 : vector<2x20xf32>
    %cst_35 = arith.constant dense<0.000000e+00> : vector<2x16xf32>
    %196 = tpu.matmul %195, %3, %cst_35 {dimension_numbers = #tpu.dot_dimension_numbers<[1], [1], [0], [0], [0, 0, 1, 0], [], []>} : vector<2x20xf32>, vector<16x20xf32>, vector<2x16xf32> -> vector<2x16xf32>
    %cst_36 = arith.constant 7.000000e+00 : f32
    %197 = vector.broadcast %cst_36 : f32 to vector<2x16xf32>
    %198 = arith.mulf %196, %197 : vector<2x16xf32>
    %199 = vector.extract_strided_slice %198 {offsets = [0, 0], sizes = [2, 4], strides = [1, 1]} : vector<2x16xf32> to vector<2x4xf32>
    %200 = vector.extract_strided_slice %198 {offsets = [0, 4], sizes = [2, 4], strides = [1, 1]} : vector<2x16xf32> to vector<2x4xf32>
    %201 = vector.extract_strided_slice %198 {offsets = [0, 8], sizes = [2, 4], strides = [1, 1]} : vector<2x16xf32> to vector<2x4xf32>
    %202 = vector.extract_strided_slice %198 {offsets = [0, 12], sizes = [2, 4], strides = [1, 1]} : vector<2x16xf32> to vector<2x4xf32>
    %203 = arith.maximumf %199, %200 : vector<2x4xf32>
    %204 = arith.maximumf %203, %201 : vector<2x4xf32>
    %205 = arith.maximumf %204, %202 : vector<2x4xf32>
    %206 = arith.subf %199, %205 : vector<2x4xf32>
    %207 = math.exp %206 : vector<2x4xf32>
    %208 = arith.subf %200, %205 : vector<2x4xf32>
    %209 = math.exp %208 : vector<2x4xf32>
    %210 = arith.subf %201, %205 : vector<2x4xf32>
    %211 = math.exp %210 : vector<2x4xf32>
    %212 = arith.subf %202, %205 : vector<2x4xf32>
    %213 = math.exp %212 : vector<2x4xf32>
    %214 = arith.addf %207, %209 : vector<2x4xf32>
    %215 = arith.addf %214, %211 : vector<2x4xf32>
    %216 = arith.addf %215, %213 : vector<2x4xf32>
    %217 = tpu.reciprocal %216 : vector<2x4xf32> -> vector<2x4xf32>
    %218 = arith.mulf %207, %217 : vector<2x4xf32>
    %219 = arith.mulf %209, %217 : vector<2x4xf32>
    %220 = arith.mulf %211, %217 : vector<2x4xf32>
    %221 = arith.mulf %213, %217 : vector<2x4xf32>
    %222 = tpu.concatenate %218, %219, %220, %221 in 1 : vector<2x4xf32>, vector<2x4xf32>, vector<2x4xf32>, vector<2x4xf32> -> vector<2x16xf32>
    %223 = tpu.concatenate %126, %126, %126, %126 in 1 : vector<2x4xf32>, vector<2x4xf32>, vector<2x4xf32>, vector<2x4xf32> -> vector<2x16xf32>
    %224 = arith.mulf %222, %223 : vector<2x16xf32>
    %cst_37 = arith.constant dense<0.000000e+00> : vector<2x4xf32>
    %225 = tpu.matmul %224, %16, %cst_37 {dimension_numbers = #tpu.dot_dimension_numbers<[1], [0], [0], [1], [0, 0, 1, 1], [], []>} : vector<2x16xf32>, vector<16x4xf32>, vector<2x4xf32> -> vector<2x4xf32>
    %226 = arith.index_cast %c1_i32_22 : i32 to index
    %c0_38 = arith.constant 0 : index
    %c0_39 = arith.constant 0 : index
    %227 = vector.load %arg4[%226, %c0_38, %c0_39] : memref<4x2x4xf32, #tpu.memory_space<vmem>>, vector<1x2x4xf32>
    %228 = vector.shape_cast %227 : vector<1x2x4xf32> to vector<2x4xf32>
    %229 = vector.shape_cast %225 : vector<2x4xf32> to vector<1x2x4xf32>
    tpu.vector_store %arg4[%226, %c0_38, %c0_39], %229 {strides = array<i32>} : memref<4x2x4xf32, #tpu.memory_space<vmem>>, vector<1x2x4xf32>,
    %c2_i32 = arith.constant 2 : i32
    %230 = arith.index_cast %c2_i32 : i32 to index
    %c0_40 = arith.constant 0 : index
    %c0_41 = arith.constant 0 : index
    %231 = vector.load %arg2[%230, %c0_40, %c0_41] : memref<4x2x4xf32, #tpu.memory_space<vmem>>, vector<1x2x4xf32>
    %232 = vector.shape_cast %231 : vector<1x2x4xf32> to vector<2x4xf32>
    %cst_42 = arith.constant 1.000000e+03 : f32
    %233 = vector.broadcast %cst_42 : f32 to vector<2x4xf32>
    %234 = arith.mulf %232, %233 : vector<2x4xf32>
    %cst_43 = arith.constant dense<0xFF800000> : vector<2xf32>
    %235 = vector.multi_reduction <maximumf>, %234, %cst_43 [1] : vector<2x4xf32> to vector<2xf32>
    %236 = vector.shape_cast %235 : vector<2xf32> to vector<2x1xf32>
    %237 = vector.broadcast %236 : vector<2x1xf32> to vector<2x4xf32>
    %238 = arith.subf %234, %237 : vector<2x4xf32>
    %239 = math.exp %238 : vector<2x4xf32>
    %cst_44 = arith.constant dense<0.000000e+00> : vector<2xf32>
    %240 = vector.multi_reduction <add>, %239, %cst_44 [1] : vector<2x4xf32> to vector<2xf32>
    %241 = vector.shape_cast %240 : vector<2xf32> to vector<2x1xf32>
    %242 = tpu.reciprocal %241 {approx = true} : vector<2x1xf32> -> vector<2x1xf32>
    %243 = vector.broadcast %242 : vector<2x1xf32> to vector<2x4xf32>
    %244 = arith.mulf %239, %243 : vector<2x4xf32>
    %cst_45 = arith.constant 0.000000e+00 : f32
    %245 = vector.broadcast %cst_45 : f32 to vector<2x4xf32>
    %246 = arith.subf %245, %234 : vector<2x4xf32>
    %cst_46 = arith.constant dense<0xFF800000> : vector<2xf32>
    %247 = vector.multi_reduction <maximumf>, %246, %cst_46 [1] : vector<2x4xf32> to vector<2xf32>
    %248 = vector.shape_cast %247 : vector<2xf32> to vector<2x1xf32>
    %249 = vector.broadcast %248 : vector<2x1xf32> to vector<2x4xf32>
    %250 = arith.subf %246, %249 : vector<2x4xf32>
    %251 = math.exp %250 : vector<2x4xf32>
    %cst_47 = arith.constant dense<0.000000e+00> : vector<2xf32>
    %252 = vector.multi_reduction <add>, %251, %cst_47 [1] : vector<2x4xf32> to vector<2xf32>
    %253 = vector.shape_cast %252 : vector<2xf32> to vector<2x1xf32>
    %254 = tpu.reciprocal %253 {approx = true} : vector<2x1xf32> -> vector<2x1xf32>
    %255 = vector.broadcast %254 : vector<2x1xf32> to vector<2x4xf32>
    %256 = arith.mulf %251, %255 : vector<2x4xf32>
    %257 = vector.extract_strided_slice %256 {offsets = [0, 0], sizes = [2, 1], strides = [1, 1]} : vector<2x4xf32> to vector<2x1xf32>
    %258 = vector.broadcast %257 : vector<2x1xf32> to vector<2x4xf32>
    %259 = arith.mulf %258, %244 : vector<2x4xf32>
    %260 = vector.extract_strided_slice %256 {offsets = [0, 1], sizes = [2, 1], strides = [1, 1]} : vector<2x4xf32> to vector<2x1xf32>
    %261 = vector.broadcast %260 : vector<2x1xf32> to vector<2x4xf32>
    %262 = arith.mulf %261, %244 : vector<2x4xf32>
    %263 = vector.extract_strided_slice %256 {offsets = [0, 2], sizes = [2, 1], strides = [1, 1]} : vector<2x4xf32> to vector<2x1xf32>
    %264 = vector.broadcast %263 : vector<2x1xf32> to vector<2x4xf32>
    %265 = arith.mulf %264, %244 : vector<2x4xf32>
    %266 = vector.extract_strided_slice %256 {offsets = [0, 3], sizes = [2, 1], strides = [1, 1]} : vector<2x4xf32> to vector<2x1xf32>
    %267 = vector.broadcast %266 : vector<2x1xf32> to vector<2x4xf32>
    %268 = arith.mulf %267, %244 : vector<2x4xf32>
    %269 = tpu.concatenate %259, %262, %265, %268 in 1 : vector<2x4xf32>, vector<2x4xf32>, vector<2x4xf32>, vector<2x4xf32> -> vector<2x16xf32>
    %cst_48 = arith.constant dense<0.000000e+00> : vector<2x20xf32>
    %270 = tpu.matmul %269, %3, %cst_48 {dimension_numbers = #tpu.dot_dimension_numbers<[1], [0], [0], [1], [0, 0, 1, 1], [], []>} : vector<2x16xf32>, vector<16x20xf32>, vector<2x20xf32> -> vector<2x20xf32>
    %271 = vector.extract_strided_slice %232 {offsets = [0, 0], sizes = [2, 1], strides = [1, 1]} : vector<2x4xf32> to vector<2x1xf32>
    %272 = vector.extract_strided_slice %222 {offsets = [0, 0], sizes = [2, 4], strides = [1, 1]} : vector<2x16xf32> to vector<2x4xf32>
    %273 = vector.extract_strided_slice %232 {offsets = [0, 1], sizes = [2, 1], strides = [1, 1]} : vector<2x4xf32> to vector<2x1xf32>
    %274 = vector.extract_strided_slice %222 {offsets = [0, 4], sizes = [2, 4], strides = [1, 1]} : vector<2x16xf32> to vector<2x4xf32>
    %275 = vector.extract_strided_slice %232 {offsets = [0, 2], sizes = [2, 1], strides = [1, 1]} : vector<2x4xf32> to vector<2x1xf32>
    %276 = vector.extract_strided_slice %222 {offsets = [0, 8], sizes = [2, 4], strides = [1, 1]} : vector<2x16xf32> to vector<2x4xf32>
    %277 = vector.extract_strided_slice %232 {offsets = [0, 3], sizes = [2, 1], strides = [1, 1]} : vector<2x4xf32> to vector<2x1xf32>
    %278 = vector.extract_strided_slice %222 {offsets = [0, 12], sizes = [2, 4], strides = [1, 1]} : vector<2x16xf32> to vector<2x4xf32>
    %279 = tpu.concatenate %271, %272, %273, %274, %275, %276, %277, %278 in 1 : vector<2x1xf32>, vector<2x4xf32>, vector<2x1xf32>, vector<2x4xf32>, vector<2x1xf32>, vector<2x4xf32>, vector<2x1xf32>, vector<2x4xf32> -> vector<2x20xf32>
    %280 = arith.mulf %279, %270 : vector<2x20xf32>
    %281 = vector.extract_strided_slice %280 {offsets = [0, 0], sizes = [2, 5], strides = [1, 1]} : vector<2x20xf32> to vector<2x5xf32>
    %282 = vector.extract_strided_slice %280 {offsets = [0, 5], sizes = [2, 5], strides = [1, 1]} : vector<2x20xf32> to vector<2x5xf32>
    %283 = arith.addf %281, %282 : vector<2x5xf32>
    %284 = vector.extract_strided_slice %280 {offsets = [0, 10], sizes = [2, 5], strides = [1, 1]} : vector<2x20xf32> to vector<2x5xf32>
    %285 = arith.addf %283, %284 : vector<2x5xf32>
    %286 = vector.extract_strided_slice %280 {offsets = [0, 15], sizes = [2, 5], strides = [1, 1]} : vector<2x20xf32> to vector<2x5xf32>
    %287 = arith.addf %285, %286 : vector<2x5xf32>
    %cst_49 = arith.constant 1.000000e+03 : f32
    %288 = vector.broadcast %cst_49 : f32 to vector<2x5xf32>
    %289 = arith.mulf %287, %288 : vector<2x5xf32>
    %cst_50 = arith.constant dense<0xFF800000> : vector<2xf32>
    %290 = vector.multi_reduction <maximumf>, %289, %cst_50 [1] : vector<2x5xf32> to vector<2xf32>
    %291 = vector.shape_cast %290 : vector<2xf32> to vector<2x1xf32>
    %292 = vector.broadcast %291 : vector<2x1xf32> to vector<2x5xf32>
    %293 = arith.subf %289, %292 : vector<2x5xf32>
    %294 = math.exp %293 : vector<2x5xf32>
    %cst_51 = arith.constant dense<0.000000e+00> : vector<2xf32>
    %295 = vector.multi_reduction <add>, %294, %cst_51 [1] : vector<2x5xf32> to vector<2xf32>
    %296 = vector.shape_cast %295 : vector<2xf32> to vector<2x1xf32>
    %297 = tpu.reciprocal %296 : vector<2x1xf32> -> vector<2x1xf32>
    %298 = vector.broadcast %297 : vector<2x1xf32> to vector<2x5xf32>
    %299 = arith.mulf %294, %298 : vector<2x5xf32>
    %300 = tpu.concatenate %299, %299, %299, %299 in 1 : vector<2x5xf32>, vector<2x5xf32>, vector<2x5xf32>, vector<2x5xf32> -> vector<2x20xf32>
    %301 = arith.mulf %279, %300 : vector<2x20xf32>
    %cst_52 = arith.constant dense<0.000000e+00> : vector<2x16xf32>
    %302 = tpu.matmul %301, %3, %cst_52 {dimension_numbers = #tpu.dot_dimension_numbers<[1], [1], [0], [0], [0, 0, 1, 0], [], []>} : vector<2x20xf32>, vector<16x20xf32>, vector<2x16xf32> -> vector<2x16xf32>
    %cst_53 = arith.constant 7.000000e+00 : f32
    %303 = vector.broadcast %cst_53 : f32 to vector<2x16xf32>
    %304 = arith.mulf %302, %303 : vector<2x16xf32>
    %305 = vector.extract_strided_slice %304 {offsets = [0, 0], sizes = [2, 4], strides = [1, 1]} : vector<2x16xf32> to vector<2x4xf32>
    %306 = vector.extract_strided_slice %304 {offsets = [0, 4], sizes = [2, 4], strides = [1, 1]} : vector<2x16xf32> to vector<2x4xf32>
    %307 = vector.extract_strided_slice %304 {offsets = [0, 8], sizes = [2, 4], strides = [1, 1]} : vector<2x16xf32> to vector<2x4xf32>
    %308 = vector.extract_strided_slice %304 {offsets = [0, 12], sizes = [2, 4], strides = [1, 1]} : vector<2x16xf32> to vector<2x4xf32>
    %309 = arith.maximumf %305, %306 : vector<2x4xf32>
    %310 = arith.maximumf %309, %307 : vector<2x4xf32>
    %311 = arith.maximumf %310, %308 : vector<2x4xf32>
    %312 = arith.subf %305, %311 : vector<2x4xf32>
    %313 = math.exp %312 : vector<2x4xf32>
    %314 = arith.subf %306, %311 : vector<2x4xf32>
    %315 = math.exp %314 : vector<2x4xf32>
    %316 = arith.subf %307, %311 : vector<2x4xf32>
    %317 = math.exp %316 : vector<2x4xf32>
    %318 = arith.subf %308, %311 : vector<2x4xf32>
    %319 = math.exp %318 : vector<2x4xf32>
    %320 = arith.addf %313, %315 : vector<2x4xf32>
    %321 = arith.addf %320, %317 : vector<2x4xf32>
    %322 = arith.addf %321, %319 : vector<2x4xf32>
    %323 = tpu.reciprocal %322 : vector<2x4xf32> -> vector<2x4xf32>
    %324 = arith.mulf %313, %323 : vector<2x4xf32>
    %325 = arith.mulf %315, %323 : vector<2x4xf32>
    %326 = arith.mulf %317, %323 : vector<2x4xf32>
    %327 = arith.mulf %319, %323 : vector<2x4xf32>
    %328 = tpu.concatenate %324, %325, %326, %327 in 1 : vector<2x4xf32>, vector<2x4xf32>, vector<2x4xf32>, vector<2x4xf32> -> vector<2x16xf32>
    %329 = tpu.concatenate %232, %232, %232, %232 in 1 : vector<2x4xf32>, vector<2x4xf32>, vector<2x4xf32>, vector<2x4xf32> -> vector<2x16xf32>
    %330 = arith.mulf %328, %329 : vector<2x16xf32>
    %cst_54 = arith.constant dense<0.000000e+00> : vector<2x4xf32>
    %331 = tpu.matmul %330, %16, %cst_54 {dimension_numbers = #tpu.dot_dimension_numbers<[1], [0], [0], [1], [0, 0, 1, 1], [], []>} : vector<2x16xf32>, vector<16x4xf32>, vector<2x4xf32> -> vector<2x4xf32>
    %332 = arith.index_cast %c2_i32 : i32 to index
    %c0_55 = arith.constant 0 : index
    %c0_56 = arith.constant 0 : index
    %333 = vector.load %arg4[%332, %c0_55, %c0_56] : memref<4x2x4xf32, #tpu.memory_space<vmem>>, vector<1x2x4xf32>
    %334 = vector.shape_cast %333 : vector<1x2x4xf32> to vector<2x4xf32>
    %335 = vector.shape_cast %331 : vector<2x4xf32> to vector<1x2x4xf32>
    tpu.vector_store %arg4[%332, %c0_55, %c0_56], %335 {strides = array<i32>} : memref<4x2x4xf32, #tpu.memory_space<vmem>>, vector<1x2x4xf32>,
    %c3_i32 = arith.constant 3 : i32
    %336 = arith.index_cast %c3_i32 : i32 to index
    %c0_57 = arith.constant 0 : index
    %c0_58 = arith.constant 0 : index
    %337 = vector.load %arg2[%336, %c0_57, %c0_58] : memref<4x2x4xf32, #tpu.memory_space<vmem>>, vector<1x2x4xf32>
    %338 = vector.shape_cast %337 : vector<1x2x4xf32> to vector<2x4xf32>
    %cst_59 = arith.constant 1.000000e+03 : f32
    %339 = vector.broadcast %cst_59 : f32 to vector<2x4xf32>
    %340 = arith.mulf %338, %339 : vector<2x4xf32>
    %cst_60 = arith.constant dense<0xFF800000> : vector<2xf32>
    %341 = vector.multi_reduction <maximumf>, %340, %cst_60 [1] : vector<2x4xf32> to vector<2xf32>
    %342 = vector.shape_cast %341 : vector<2xf32> to vector<2x1xf32>
    %343 = vector.broadcast %342 : vector<2x1xf32> to vector<2x4xf32>
    %344 = arith.subf %340, %343 : vector<2x4xf32>
    %345 = math.exp %344 : vector<2x4xf32>
    %cst_61 = arith.constant dense<0.000000e+00> : vector<2xf32>
    %346 = vector.multi_reduction <add>, %345, %cst_61 [1] : vector<2x4xf32> to vector<2xf32>
    %347 = vector.shape_cast %346 : vector<2xf32> to vector<2x1xf32>
    %348 = tpu.reciprocal %347 {approx = true} : vector<2x1xf32> -> vector<2x1xf32>
    %349 = vector.broadcast %348 : vector<2x1xf32> to vector<2x4xf32>
    %350 = arith.mulf %345, %349 : vector<2x4xf32>
    %cst_62 = arith.constant 0.000000e+00 : f32
    %351 = vector.broadcast %cst_62 : f32 to vector<2x4xf32>
    %352 = arith.subf %351, %340 : vector<2x4xf32>
    %cst_63 = arith.constant dense<0xFF800000> : vector<2xf32>
    %353 = vector.multi_reduction <maximumf>, %352, %cst_63 [1] : vector<2x4xf32> to vector<2xf32>
    %354 = vector.shape_cast %353 : vector<2xf32> to vector<2x1xf32>
    %355 = vector.broadcast %354 : vector<2x1xf32> to vector<2x4xf32>
    %356 = arith.subf %352, %355 : vector<2x4xf32>
    %357 = math.exp %356 : vector<2x4xf32>
    %cst_64 = arith.constant dense<0.000000e+00> : vector<2xf32>
    %358 = vector.multi_reduction <add>, %357, %cst_64 [1] : vector<2x4xf32> to vector<2xf32>
    %359 = vector.shape_cast %358 : vector<2xf32> to vector<2x1xf32>
    %360 = tpu.reciprocal %359 {approx = true} : vector<2x1xf32> -> vector<2x1xf32>
    %361 = vector.broadcast %360 : vector<2x1xf32> to vector<2x4xf32>
    %362 = arith.mulf %357, %361 : vector<2x4xf32>
    %363 = vector.extract_strided_slice %362 {offsets = [0, 0], sizes = [2, 1], strides = [1, 1]} : vector<2x4xf32> to vector<2x1xf32>
    %364 = vector.broadcast %363 : vector<2x1xf32> to vector<2x4xf32>
    %365 = arith.mulf %364, %350 : vector<2x4xf32>
    %366 = vector.extract_strided_slice %362 {offsets = [0, 1], sizes = [2, 1], strides = [1, 1]} : vector<2x4xf32> to vector<2x1xf32>
    %367 = vector.broadcast %366 : vector<2x1xf32> to vector<2x4xf32>
    %368 = arith.mulf %367, %350 : vector<2x4xf32>
    %369 = vector.extract_strided_slice %362 {offsets = [0, 2], sizes = [2, 1], strides = [1, 1]} : vector<2x4xf32> to vector<2x1xf32>
    %370 = vector.broadcast %369 : vector<2x1xf32> to vector<2x4xf32>
    %371 = arith.mulf %370, %350 : vector<2x4xf32>
    %372 = vector.extract_strided_slice %362 {offsets = [0, 3], sizes = [2, 1], strides = [1, 1]} : vector<2x4xf32> to vector<2x1xf32>
    %373 = vector.broadcast %372 : vector<2x1xf32> to vector<2x4xf32>
    %374 = arith.mulf %373, %350 : vector<2x4xf32>
    %375 = tpu.concatenate %365, %368, %371, %374 in 1 : vector<2x4xf32>, vector<2x4xf32>, vector<2x4xf32>, vector<2x4xf32> -> vector<2x16xf32>
    %cst_65 = arith.constant dense<0.000000e+00> : vector<2x20xf32>
    %376 = tpu.matmul %375, %3, %cst_65 {dimension_numbers = #tpu.dot_dimension_numbers<[1], [0], [0], [1], [0, 0, 1, 1], [], []>} : vector<2x16xf32>, vector<16x20xf32>, vector<2x20xf32> -> vector<2x20xf32>
    %377 = vector.extract_strided_slice %338 {offsets = [0, 0], sizes = [2, 1], strides = [1, 1]} : vector<2x4xf32> to vector<2x1xf32>
    %378 = vector.extract_strided_slice %328 {offsets = [0, 0], sizes = [2, 4], strides = [1, 1]} : vector<2x16xf32> to vector<2x4xf32>
    %379 = vector.extract_strided_slice %338 {offsets = [0, 1], sizes = [2, 1], strides = [1, 1]} : vector<2x4xf32> to vector<2x1xf32>
    %380 = vector.extract_strided_slice %328 {offsets = [0, 4], sizes = [2, 4], strides = [1, 1]} : vector<2x16xf32> to vector<2x4xf32>
    %381 = vector.extract_strided_slice %338 {offsets = [0, 2], sizes = [2, 1], strides = [1, 1]} : vector<2x4xf32> to vector<2x1xf32>
    %382 = vector.extract_strided_slice %328 {offsets = [0, 8], sizes = [2, 4], strides = [1, 1]} : vector<2x16xf32> to vector<2x4xf32>
    %383 = vector.extract_strided_slice %338 {offsets = [0, 3], sizes = [2, 1], strides = [1, 1]} : vector<2x4xf32> to vector<2x1xf32>
    %384 = vector.extract_strided_slice %328 {offsets = [0, 12], sizes = [2, 4], strides = [1, 1]} : vector<2x16xf32> to vector<2x4xf32>
    %385 = tpu.concatenate %377, %378, %379, %380, %381, %382, %383, %384 in 1 : vector<2x1xf32>, vector<2x4xf32>, vector<2x1xf32>, vector<2x4xf32>, vector<2x1xf32>, vector<2x4xf32>, vector<2x1xf32>, vector<2x4xf32> -> vector<2x20xf32>
    %386 = arith.mulf %385, %376 : vector<2x20xf32>
    %387 = vector.extract_strided_slice %386 {offsets = [0, 0], sizes = [2, 5], strides = [1, 1]} : vector<2x20xf32> to vector<2x5xf32>
    %388 = vector.extract_strided_slice %386 {offsets = [0, 5], sizes = [2, 5], strides = [1, 1]} : vector<2x20xf32> to vector<2x5xf32>
    %389 = arith.addf %387, %388 : vector<2x5xf32>
    %390 = vector.extract_strided_slice %386 {offsets = [0, 10], sizes = [2, 5], strides = [1, 1]} : vector<2x20xf32> to vector<2x5xf32>
    %391 = arith.addf %389, %390 : vector<2x5xf32>
    %392 = vector.extract_strided_slice %386 {offsets = [0, 15], sizes = [2, 5], strides = [1, 1]} : vector<2x20xf32> to vector<2x5xf32>
    %393 = arith.addf %391, %392 : vector<2x5xf32>
    %cst_66 = arith.constant 1.000000e+03 : f32
    %394 = vector.broadcast %cst_66 : f32 to vector<2x5xf32>
    %395 = arith.mulf %393, %394 : vector<2x5xf32>
    %cst_67 = arith.constant dense<0xFF800000> : vector<2xf32>
    %396 = vector.multi_reduction <maximumf>, %395, %cst_67 [1] : vector<2x5xf32> to vector<2xf32>
    %397 = vector.shape_cast %396 : vector<2xf32> to vector<2x1xf32>
    %398 = vector.broadcast %397 : vector<2x1xf32> to vector<2x5xf32>
    %399 = arith.subf %395, %398 : vector<2x5xf32>
    %400 = math.exp %399 : vector<2x5xf32>
    %cst_68 = arith.constant dense<0.000000e+00> : vector<2xf32>
    %401 = vector.multi_reduction <add>, %400, %cst_68 [1] : vector<2x5xf32> to vector<2xf32>
    %402 = vector.shape_cast %401 : vector<2xf32> to vector<2x1xf32>
    %403 = tpu.reciprocal %402 : vector<2x1xf32> -> vector<2x1xf32>
    %404 = vector.broadcast %403 : vector<2x1xf32> to vector<2x5xf32>
    %405 = arith.mulf %400, %404 : vector<2x5xf32>
    %406 = tpu.concatenate %405, %405, %405, %405 in 1 : vector<2x5xf32>, vector<2x5xf32>, vector<2x5xf32>, vector<2x5xf32> -> vector<2x20xf32>
    %407 = arith.mulf %385, %406 : vector<2x20xf32>
    %cst_69 = arith.constant dense<0.000000e+00> : vector<2x16xf32>
    %408 = tpu.matmul %407, %3, %cst_69 {dimension_numbers = #tpu.dot_dimension_numbers<[1], [1], [0], [0], [0, 0, 1, 0], [], []>} : vector<2x20xf32>, vector<16x20xf32>, vector<2x16xf32> -> vector<2x16xf32>
    %cst_70 = arith.constant 7.000000e+00 : f32
    %409 = vector.broadcast %cst_70 : f32 to vector<2x16xf32>
    %410 = arith.mulf %408, %409 : vector<2x16xf32>
    %411 = vector.extract_strided_slice %410 {offsets = [0, 0], sizes = [2, 4], strides = [1, 1]} : vector<2x16xf32> to vector<2x4xf32>
    %412 = vector.extract_strided_slice %410 {offsets = [0, 4], sizes = [2, 4], strides = [1, 1]} : vector<2x16xf32> to vector<2x4xf32>
    %413 = vector.extract_strided_slice %410 {offsets = [0, 8], sizes = [2, 4], strides = [1, 1]} : vector<2x16xf32> to vector<2x4xf32>
    %414 = vector.extract_strided_slice %410 {offsets = [0, 12], sizes = [2, 4], strides = [1, 1]} : vector<2x16xf32> to vector<2x4xf32>
    %415 = arith.maximumf %411, %412 : vector<2x4xf32>
    %416 = arith.maximumf %415, %413 : vector<2x4xf32>
    %417 = arith.maximumf %416, %414 : vector<2x4xf32>
    %418 = arith.subf %411, %417 : vector<2x4xf32>
    %419 = math.exp %418 : vector<2x4xf32>
    %420 = arith.subf %412, %417 : vector<2x4xf32>
    %421 = math.exp %420 : vector<2x4xf32>
    %422 = arith.subf %413, %417 : vector<2x4xf32>
    %423 = math.exp %422 : vector<2x4xf32>
    %424 = arith.subf %414, %417 : vector<2x4xf32>
    %425 = math.exp %424 : vector<2x4xf32>
    %426 = arith.addf %419, %421 : vector<2x4xf32>
    %427 = arith.addf %426, %423 : vector<2x4xf32>
    %428 = arith.addf %427, %425 : vector<2x4xf32>
    %429 = tpu.reciprocal %428 : vector<2x4xf32> -> vector<2x4xf32>
    %430 = arith.mulf %419, %429 : vector<2x4xf32>
    %431 = arith.mulf %421, %429 : vector<2x4xf32>
    %432 = arith.mulf %423, %429 : vector<2x4xf32>
    %433 = arith.mulf %425, %429 : vector<2x4xf32>
    %434 = tpu.concatenate %430, %431, %432, %433 in 1 : vector<2x4xf32>, vector<2x4xf32>, vector<2x4xf32>, vector<2x4xf32> -> vector<2x16xf32>
    %435 = tpu.concatenate %338, %338, %338, %338 in 1 : vector<2x4xf32>, vector<2x4xf32>, vector<2x4xf32>, vector<2x4xf32> -> vector<2x16xf32>
    %436 = arith.mulf %434, %435 : vector<2x16xf32>
    %cst_71 = arith.constant dense<0.000000e+00> : vector<2x4xf32>
    %437 = tpu.matmul %436, %16, %cst_71 {dimension_numbers = #tpu.dot_dimension_numbers<[1], [0], [0], [1], [0, 0, 1, 1], [], []>} : vector<2x16xf32>, vector<16x4xf32>, vector<2x4xf32> -> vector<2x4xf32>
    %438 = arith.index_cast %c3_i32 : i32 to index
    %c0_72 = arith.constant 0 : index
    %c0_73 = arith.constant 0 : index
    %439 = vector.load %arg4[%438, %c0_72, %c0_73] : memref<4x2x4xf32, #tpu.memory_space<vmem>>, vector<1x2x4xf32>
    %440 = vector.shape_cast %439 : vector<1x2x4xf32> to vector<2x4xf32>
    %441 = vector.shape_cast %437 : vector<2x4xf32> to vector<1x2x4xf32>
    tpu.vector_store %arg4[%438, %c0_72, %c0_73], %441 {strides = array<i32>} : memref<4x2x4xf32, #tpu.memory_space<vmem>>, vector<1x2x4xf32>,
    %c4_i32_74 = arith.constant 4 : i32
    %c0_75 = arith.constant 0 : index
    %c0_76 = arith.constant 0 : index
    %442 = vector.load %arg5[%c0_75, %c0_76] : memref<2x16xf32, #tpu.memory_space<vmem>>, vector<2x16xf32>
    tpu.vector_store %arg5[%c0_75, %c0_76], %434 {strides = array<i32>} : memref<2x16xf32, #tpu.memory_space<vmem>>, vector<2x16xf32>,
    return
  }
  func.func @transform_0(%arg0: i32, %arg1: i32) -> (i32, i32, i32) {
    %c0_i32 = arith.constant 0 : i32
    %c0_i32_0 = arith.constant 0 : i32
    return %arg1, %arg0, %c0_i32 : i32, i32, i32
  }
  func.func @transform_2(%arg0: i32, %arg1: i32) -> (i32, i32, i32) {
    %c0_i32 = arith.constant 0 : i32
    %c0_i32_0 = arith.constant 0 : i32
    return %arg1, %arg0, %c0_i32 : i32, i32, i32
  }
  func.func @transform_3(%arg0: i32, %arg1: i32) -> (i32, i32) {
    %c0_i32 = arith.constant 0 : i32
    %c0_i32_0 = arith.constant 0 : i32
    return %arg0, %c0_i32 : i32, i32
  }
}

</mosaic_0001>

<llo_original>
// kernel: tpu_custom_call.1
$region0: #{tpu_custom_call.1}
  #allocation0 [shape = 'u32[]', space=smem, size = 0x4, offset = 0x4, fixed_abs, tag = 'smem constant byte address 0x4 - core index']
  #allocation1 [shape = 'u32[144,128]{1,0:T(1,128)}', space=vmem, size = 0x12000, scoped, tag = 'internal scratch']
  #allocation2 [shape = 'f32[16,20]{1,0:T(8,128)}', space=vmem, size = 0x2000, scoped, tag = 'scratch operand']
  #allocation3 [shape = 's32[1]{0}', space=sflag, size = 0x4, scoped, tag = 'scratch operand']
  #allocation10 [shape = 's32[]', space=sflag, size = 0x4, offset = 0, fixed_abs, tag = 'sflag constant byte address 0x0 - dummy sync flag']
  #allocation11 [shape = 's32[]', space=sflag, size = 0x4, offset = 0, fixed_abs, tag = 'sflag constant byte address 0x0 - dummy sync flag']
  #allocation12 [shape = 'u32[]', space=smem, size = 0x4, offset = 0x44, fixed_abs, tag = 'smem constant byte address 0x44 - assertion arg 0']
  #allocation13 [shape = 'u32[]', space=smem, size = 0x4, offset = 0x48, fixed_abs, tag = 'smem constant byte address 0x48 - assertion arg 1']
  %s0 = inlined_call_operand.hbm [shape: f32[8,2,4], index: 0, kind: input, shape index: {}]
  %s1 = inlined_call_operand.hbm [shape: f32[16,20], index: 1, kind: input, shape index: {}]
  %s2 = inlined_call_operand.hbm [shape: f32[8,2,4], index: 2, kind: output, shape index: {0}]
  %s3 = inlined_call_operand.hbm [shape: f32[2,16], index: 3, kind: output, shape index: {1}]
  %4 = xla_tuple %s2, %s3
  %s5 = sld [smem:[#allocation0]]
  $region57: #{tpu_custom_call.1} parent=0
    _
  %s7 = ssub.s32 1, %s5
  %s8 = scalar_select 0, %s7, %s5
  $region1: #{tpu_custom_call.1} parent=0
    #allocation4 [shape = 'u8[8192]{0}', space=vmem, size = 0x2000, scoped, tag = 'input window, operand 0']
    #allocation5 [shape = 's32[2]{0}', space=sflag, size = 0x8, scoped, tag = 'scoped memory for tpu_custom_call.1']
    #allocation6 [shape = 's32[2]{0}', space=sflag, size = 0x8, scoped, tag = 'scoped memory for tpu_custom_call.1']
    #allocation7 [shape = 'u8[8192]{0}', space=vmem, size = 0x2000, scoped, tag = 'output window, operand 0']
    #allocation8 [shape = 'u8[1024]{0}', space=vmem, size = 0x400, scoped, tag = 'output window, operand 1, single buffered']
    #allocation9 [shape = 's32[1]{0}', space=sflag, size = 0x4, scoped, tag = 'scoped memory for tpu_custom_call.1']
    %9 = vsyncpa [#allocation5], 0
    %s10 = scalar_lea.sflag [#allocation5], 1
    %11 = vsyncpa %s10, 0
    %12 = vsyncpa [#allocation6], 0
    %s13 = scalar_lea.sflag [#allocation6], 1
    %14 = vsyncpa %s13, 0
    %15 = vsyncpa [#allocation9], 0
    loop: start=0, step=1, limit=4
    $region2: #{tpu_custom_call.1} parent=1 // loop_pre_header
      _
    $region3: #{tpu_custom_call.1} parent=1 // loop_header
      %s17 = sphi 0, %s21
      %p18 = scmp.ge.s32.totalorder %s17, 4
      %s24 = sphi 0, %s36
      %s25 = sphi 0, %s32
      %s26 = sphi 0, %s24
      %s27 = sphi 0, %s25
      %s28 = sphi 0, %s26
      %s29 = sphi 0, %s27
      %s41 = sphi 0, %s43
      %s44 = sphi 0, %s41
      %s45 = sphi 0, %s44
      %s61 = sphi 0, %s45
      %s69 = sphi 0, %s71
      %s72 = sphi 0, %s69
      %s73 = sphi 0, %s72
      %s89 = sphi 0, %s73
      %s95 = sphi 0, %s97
      %s98 = sphi 0, %s95
      %s99 = sphi 0, %s98
      %s115 = sphi 0, %s99
    $region4: #{tpu_custom_call.1} parent=1 // loop_header_branch
      %20 = sbr.rel (%p18) target = $region8
    $region5: #{tpu_custom_call.1} parent=1 // loop_body
      %s22 = ssub.s32 %s17, 1
      %s23 = ssub.s32 %s17, 2
      %s30 = sadd.s32 1, %s25
      %p31 = scmp.ge.s32.totalorder %s30, 2
      %s32 = scalar_select %p31, 0, %s30
      %s33 = sadd.s32 1, %s24
      %s34 = scalar_select %p31, %s33, %s24
      %p35 = scmp.ge.s32.totalorder %s34, 1
      %s36 = scalar_select %p35, 0, %s34
      %s37 = ssub.s32 %s25, %s32
      %s38 = ssub.s32 %s24, %s36
      %s39 = sor.u32 %s37, %s38
      %p40 = scmp.eq.s32.totalorder %s39, 0
      %s42 = sadd.s32 %s41, 1
      %s43 = scalar_select %p40, %s41, %s42
      %p46 = pneg %p40
      %p47 = scmp.eq.s32.totalorder %s17, 1
      %p48 = por %p46, %p47
      %p49 = scmp.ne.s32.totalorder %s41, %s44
      %p50 = scmp.eq.s32.totalorder %s17, 0
      %p51 = por %p49, %p50
      %p52 = scmp.ne.s32.totalorder %s41, %s44
      %p53 = scmp.eq.s32.totalorder %s22, 1
      %p54 = por %p52, %p53
      %p55 = scmp.ne.s32.totalorder %s44, %s45
      %p56 = scmp.eq.s32.totalorder %s22, 0
      %p57 = por %p55, %p56
      %p58 = scmp.ne.s32.totalorder %s44, %s45
      %p59 = scmp.eq.s32.totalorder %s23, 1
      %p60 = por %p58, %p59
      %p62 = scmp.ne.s32.totalorder %s45, %s61
      %p63 = scmp.eq.s32.totalorder %s23, 0
      %p64 = por %p62, %p63
      %s65 = ssub.s32 %s25, %s32
      %s66 = ssub.s32 %s24, %s36
      %s67 = sor.u32 %s65, %s66
      %p68 = scmp.eq.s32.totalorder %s67, 0
      %s70 = sadd.s32 %s69, 1
      %s71 = scalar_select %p68, %s69, %s70
      %p74 = pneg %p68
      %p75 = scmp.eq.s32.totalorder %s17, 1
      %p76 = por %p74, %p75
      %p77 = scmp.ne.s32.totalorder %s69, %s72
      %p78 = scmp.eq.s32.totalorder %s17, 0
      %p79 = por %p77, %p78
      %p80 = scmp.ne.s32.totalorder %s69, %s72
      %p81 = scmp.eq.s32.totalorder %s22, 1
      %p82 = por %p80, %p81
      %p83 = scmp.ne.s32.totalorder %s72, %s73
      %p84 = scmp.eq.s32.totalorder %s22, 0
      %p85 = por %p83, %p84
      %p86 = scmp.ne.s32.totalorder %s72, %s73
      %p87 = scmp.eq.s32.totalorder %s23, 1
      %p88 = por %p86, %p87
      %p90 = scmp.ne.s32.totalorder %s73, %s89
      %p91 = scmp.eq.s32.totalorder %s23, 0
      %p92 = por %p90, %p91
      %s93 = ssub.s32 %s24, %s36
      %p94 = scmp.eq.s32.totalorder %s93, 0
      %s96 = sadd.s32 %s95, 1
      %s97 = scalar_select %p94, %s95, %s96
      %p100 = pneg %p94
      %p101 = scmp.eq.s32.totalorder %s17, 1
      %p102 = por %p100, %p101
      %p103 = scmp.ne.s32.totalorder %s95, %s98
      %p104 = scmp.eq.s32.totalorder %s17, 0
      %p105 = por %p103, %p104
      %p106 = scmp.ne.s32.totalorder %s95, %s98
      %p107 = scmp.eq.s32.totalorder %s22, 1
      %p108 = por %p106, %p107
      %p109 = scmp.ne.s32.totalorder %s98, %s99
      %p110 = scmp.eq.s32.totalorder %s22, 0
      %p111 = por %p109, %p110
      %p112 = scmp.ne.s32.totalorder %s98, %s99
      %p113 = scmp.eq.s32.totalorder %s23, 1
      %p114 = por %p112, %p113
      %p116 = scmp.ne.s32.totalorder %s99, %s115
      %p117 = scmp.eq.s32.totalorder %s23, 0
      %p118 = por %p116, %p117
      %p119 = scmp.le.s32.totalorder 1, %s17
      %p120 = scmp.lt.s32.totalorder %s17, 3
      %p121 = pnand %p119, %p120
      %p122 = pneg %p121
      // Predicated region
      $region9: #{tpu_custom_call.1} parent=5 // pred_check
        _
      $region10: #{tpu_custom_call.1} parent=5 // pred_check_branch
        %124 = sbr.rel (%p121) target = $region12
      $region11: #{tpu_custom_call.1} parent=5 // pred_region
        %s125 = ssub.s32 %s17, 1
      $region12: #{tpu_custom_call.1} parent=5 // pred_fallthru
        _
      %p126 = scmp.lt.s32.totalorder %s17, 2
      // Predicated region
      $region13: #{tpu_custom_call.1} parent=5 // pred_check
        %p127 = pneg %p126
      $region14: #{tpu_custom_call.1} parent=5 // pred_check_branch
        %129 = sbr.rel (%p127) target = $region16
      $region15: #{tpu_custom_call.1} parent=5 // pred_region
        // Predicated region
        $region17: #{tpu_custom_call.1} parent=15 // pred_check
          %p130 = pneg %p51
        $region18: #{tpu_custom_call.1} parent=15 // pred_check_branch
          %132 = sbr.rel (%p130) target = $region20
        $region19: #{tpu_custom_call.1} parent=15 // pred_region
          %s133 = sand.u32 %s41, 1
          %s134 = scalar_lea.sflag [#allocation5], %s133
          %s135 = sand.u32 %s41, 1
          %s136 = smul.addr %s135, 8
          %s137 = scalar_lea.vmem [#allocation4], %s136
          %s138 = smul.u32 4, %s25
          %s140 = ssub.s32 128, 128
          %141 = vsyncadd %s134, %s140
          %s142 = sadd.s32 %s24, %s138
          %s143 = smul.addr %s142, 32
          %s144 = scalar_lea.hbm %s0, %s143
          %s145 = sshll.u32 %s137, 4
          %s146 = int_to_ptr.vmem [resolvable:$true] %s145
          %151 = dma.hbm_to_vmem [thread:$0]  %s144, 128, %s146, %s134, 32, 32, 2
        $region20: #{tpu_custom_call.1} parent=15 // pred_fallthru
          _
      $region16: #{tpu_custom_call.1} parent=5 // pred_fallthru
        _
      %p152 = scmp.le.s32.totalorder 1, %s17
      %p153 = scmp.lt.s32.totalorder %s17, 3
      %p154 = pnand %p152, %p153
      %p155 = pneg %p154
      // Predicated region
      $region21: #{tpu_custom_call.1} parent=5 // pred_check
        _
      $region22: #{tpu_custom_call.1} parent=5 // pred_check_branch
        %157 = sbr.rel (%p154) target = $region24
      $region23: #{tpu_custom_call.1} parent=5 // pred_region
        %s158 = ssub.s32 %s17, 1
        %s159 = sand.u32 %s44, 1
        %s160 = scalar_lea.sflag [#allocation5], %s159
        %s161 = sand.u32 %s44, 1
        %s162 = smul.addr %s161, 8
        %s163 = scalar_lea.vmem [#allocation4], %s162
        // Predicated region
        $region25: #{tpu_custom_call.1} parent=23 // pred_check
          %p164 = pneg %p57
        $region26: #{tpu_custom_call.1} parent=23 // pred_check_branch
          %166 = sbr.rel (%p164) target = $region28
        $region27: #{tpu_custom_call.1} parent=23 // pred_region
          %167 = dma.done %s160, 128
        $region28: #{tpu_custom_call.1} parent=23 // pred_fallthru
          _
        %s168 = sand.u32 %s44, 1
        %s169 = scalar_lea.sflag [#allocation5], %s168
        %s170 = sand.u32 %s44, 1
        %s171 = smul.addr %s170, 8
        %s172 = scalar_lea.vmem [#allocation4], %s171
        %p173 = pneg %p57
        %p174 = pneg %p54
        %p175 = pneg %p85
        %p176 = pneg %p82
        %s177 = sand.u32 %s72, 1
        %s178 = scalar_lea.sflag [#allocation6], %s177
        %s179 = sand.u32 %s72, 1
        %s180 = smul.addr %s179, 8
        %s181 = scalar_lea.vmem [#allocation7], %s180
        %p182 = pneg %p111
        %p183 = pneg %p108
        %s184 = smul.u32 4, %s27
        %s185 = smul.u32 4, %s27
        %p186 = scmp.eq.s32.totalorder %s27, 0
        // Predicated region
        $region29: #{tpu_custom_call.1} parent=23 // pred_check
          %p187 = pneg %p186
        $region30: #{tpu_custom_call.1} parent=23 // pred_check_branch
          %189 = sbr.rel (%p187) target = $region32
        $region31: #{tpu_custom_call.1} parent=23 // pred_region
          // Predicated region
          $region33: #{tpu_custom_call.1} parent=31 // pred_check
            _
          $region34: #{tpu_custom_call.1} parent=31 // pred_check_branch
            %191 = sbr.rel target = $region36
          $region35: #{tpu_custom_call.1} parent=31 // pred_region
            %192 = sst [smem:[#allocation12]] [#allocation11]
            %193 = sst [smem:[#allocation13]] [#allocation10]
          $region36: #{tpu_custom_call.1} parent=31 // pred_fallthru
            _
          %195 = shalt.err (0)
          %s197 = sshll.u32 [#allocation2], 4
          %s198 = int_to_ptr.vmem [resolvable:$true] %s197
          %200 = dma.hbm_to_vmem [thread:$0]  %s1, 256, %s198, [#allocation3]
          %s201 = smul.u32 16, 1
          %s202 = sshll.u32 %s201, 4
          %203 = dma.done [#allocation3], %s202
          %vm204 = vcmask 123904
          %205 = vst.msk [vmem:[#allocation8] sm:$0x3] %vm204, 0.25
        $region32: #{tpu_custom_call.1} parent=23 // pred_fallthru
          _
        %v206 = vld [vmem:[#allocation2] sm:$0xff]
        %v207 = vld [vmem:[#allocation2 + $0x8] sm:$0xff]
        %v208 = vlaneseq
        %v209 = vshrl.u32 %v208, 7
        %v210 = vadd.s32 %v209, 8
        %v211 = vlaneseq
        %v212 = vand.u32 %v211, 127
        %v213 = vmul.u32 %v212, 4
        %vm214 = vcmp.ge.s32.totalorder %v209, %v213
        %vm215 = vcmp.ge.s32.totalorder %v210, %v213
        %v216 = vadd.s32 %v212, 1
        %v217 = vmul.u32 %v216, 4
        %vm218 = vcmp.lt.s32.totalorder %v209, %v217
        %vm219 = vcmp.lt.s32.totalorder %v210, %v217
        %vm220 = vmand %vm214, %vm218
        %vm221 = vmand %vm215, %vm219
        %v222 = vsel %vm220, 1, 0
        %v223 = vsel %vm221, 1, 0
        %v224 = vcvt.s32.f32 %v222
        %v225 = vcvt.s32.f32 %v223
        %v226 = vld [vmem:[#allocation8] sm:$0x3]
        %v227 = vld [vmem:[%s163] sm:$0x3]
        %v228 = vmul.f32 %v227, 1000.0
        %vm229 = vcmask 25600
        %v230 = vsel %vm229, %v228, -inf
        %231 = vmax.xlane.f32.xlu0 %v230
        %v232 = vpop.xlane.xlu0 %231
        %v233 = vsub.f32 %v228, %v232
        %v234 = vmul.f32 %v233, 1.442695
        %v235 = vpow.pop %v234
        %v236 = vsel %vm229, %v235, 0.0
        %237 = vadd.xlane.f32.xlu0 %v236
        %v238 = vpop.xlane.xlu0 %237
        %v239 = vrcp.pop %v238
        %v240 = vmul.f32 %v235, %v239
        %v241 = vsub.f32 0.0, %v228
        %v242 = vsel %vm229, %v241, -inf
        %243 = vmax.xlane.f32.xlu0 %v242
        %v244 = vpop.xlane.xlu0 %243
        %v245 = vsub.f32 %v241, %v244
        %v246 = vmul.f32 %v245, 1.442695
        %v247 = vpow.pop %v246
        %v248 = vsel %vm229, %v247, 0.0
        %249 = vadd.xlane.f32.xlu0 %v248
        %v250 = vpop.xlane.xlu0 %249
        %v251 = vrcp.pop %v250
        %v252 = vmul.f32 %v247, %v251
        %254 = vset.pattern.permute.xlu0 0
        %255 = vperm.xlu0 %254, %v252
        %v256 = vpop.permute.xlu0 %255
        %v258 = vmul.f32 %v256, %v240
        %259 = vset.pattern.permute.xlu0 1
        %260 = vperm.xlu0 %259, %v252
        %v261 = vpop.permute.xlu0 %260
        %v263 = vmul.f32 %v261, %v240
        %264 = vset.pattern.permute.xlu0 2
        %265 = vperm.xlu0 %264, %v252
        %v266 = vpop.permute.xlu0 %265
        %v268 = vmul.f32 %v266, %v240
        %269 = vset.pattern.permute.xlu0 3
        %270 = vperm.xlu0 %269, %v252
        %v271 = vpop.permute.xlu0 %270
        %v273 = vmul.f32 %v271, %v240
        %275 = vrot.lane.b32.xlu0 %v263, 4
        %v276 = vpop.permute.xlu0 %275
        %279 = vrot.lane.b32.xlu0 %v268, 8
        %v280 = vpop.permute.xlu0 %279
        %283 = vrot.lane.b32.xlu0 %v273, 12
        %v284 = vpop.permute.xlu0 %283
        %vm286 = vcmask 31744
        %v287 = vsel %vm286, %v258, %v276
        %vm288 = vcmask 64512
        %v289 = vsel %vm288, %v287, %v280
        %vm290 = vcmask 97280
        %v291 = vsel %vm290, %v289, %v284
        %vm292 = vcmask 130048
        %v294 = vsel %vm292, %v291, 0
        %296 = vmatprep.subr.mxu0 0.0
        %297 = vmatpush1.msra.mxu0 %v206
        %298 = vmatprep.subr.mxu0 0.0
        %299 = vmatpush1.msra.mxu0 %v207
        %300 = vmatprep.subr.mxu0 0.0
        %301 = vmatpush1.msra.mxu0 0.0
        %302 = vmatprep.subr.mxu0 0.0
        %303 = vmatpush1.msra.mxu0 0.0
        %304 = vmatprep.subr.mxu0 0.0
        %305 = vmatpush1.msra.mxu0 0.0
        %306 = vmatprep.subr.mxu0 0.0
        %307 = vmatpush1.msra.mxu0 0.0
        %308 = vmatprep.subr.mxu0 0.0
        %309 = vmatpush1.msra.mxu0 0.0
        %310 = vmatprep.subr.mxu0 0.0
        %311 = vmatpush1.msra.mxu0 0.0
        %312 = vmatprep.subr.mxu0 0.0
        %313 = vmatpush1.msra.mxu0 0.0
        %314 = vmatprep.subr.mxu0 0.0
        %315 = vmatpush1.msra.mxu0 0.0
        %316 = vmatprep.subr.mxu0 0.0
        %317 = vmatpush1.msra.mxu0 0.0
        %318 = vmatprep.subr.mxu0 0.0
        %319 = vmatpush1.msra.mxu0 0.0
        %320 = vmatprep.subr.mxu0 0.0
        %321 = vmatpush1.msra.mxu0 0.0
        %322 = vmatprep.subr.mxu0 0.0
        %323 = vmatpush1.msra.mxu0 0.0
        %324 = vmatprep.subr.mxu0 0.0
        %325 = vmatpush1.msra.mxu0 0.0
        %326 = vmatprep.subr.mxu0 0.0
        %327 = vmatpush1.msra.mxu0 0.0
        %328 = vmatprep.subr.mxu0 0.0
        %329 = vmatpush1.msra.mxu0 0.0
        %330 = vmatprep.subr.mxu0 0.0
        %331 = vmatpush1.msra.mxu0 0.0
        %332 = vmatprep.subr.mxu0 0.0
        %333 = vmatpush1.msra.mxu0 0.0
        %334 = vmatprep.subr.mxu0 0.0
        %335 = vmatpush1.msra.mxu0 0.0
        %336 = vmatprep.subr.mxu0 0.0
        %337 = vmatpush1.msra.mxu0 0.0
        %338 = vmatprep.subr.mxu0 0.0
        %339 = vmatpush1.msra.mxu0 0.0
        %340 = vmatprep.subr.mxu0 0.0
        %341 = vmatpush1.msra.mxu0 0.0
        %342 = vmatprep.subr.mxu0 0.0
        %343 = vmatpush1.msra.mxu0 0.0
        %344 = vmatprep.subr.mxu0 0.0
        %345 = vmatpush1.msra.mxu0 0.0
        %346 = vmatprep.subr.mxu0 0.0
        %347 = vmatpush1.msra.mxu0 0.0
        %348 = vmatprep.subr.mxu0 0.0
        %349 = vmatpush1.msra.mxu0 0.0
        %350 = vmatprep.subr.mxu0 0.0
        %351 = vmatpush1.msra.mxu0 0.0
        %352 = vmatprep.subr.mxu0 0.0
        %353 = vmatpush1.msra.mxu0 0.0
        %354 = vmatprep.subr.mxu0 0.0
        %355 = vmatpush1.msra.mxu0 0.0
        %356 = vmatprep.subr.mxu0 0.0
        %357 = vmatpush1.msra.mxu0 0.0
        %358 = vmatprep.subr.mxu0 0.0
        %359 = vmatpush1.msra.mxu0 0.0
        %360 = vmatprep.mubr.f32.mxu0 0.0
        %361 = vmatmul.mubr.f32.gmra.mrb[0].mxu0 %v294
        %v362 = vpop.f32.mrb[0].mxu0
        %v363 = vadd.f32 0.0, %v362
        %v364 = vpop.f32.mrb[0].mxu0
        %365 = vdwg.mxu0
        %367 = vrot.lane.b32.xlu0 %v226, 1
        %v368 = vpop.permute.xlu0 %367
        %371 = vrot.lane.b32.xlu0 %v227, 4
        %v372 = vpop.permute.xlu0 %371
        %374 = vrot.lane.b32.xlu0 %v226, 2
        %v375 = vpop.permute.xlu0 %374
        %377 = vrot.lane.b32.xlu0 %v227, 8
        %v378 = vpop.permute.xlu0 %377
        %380 = vrot.lane.b32.xlu0 %v226, 3
        %v381 = vpop.permute.xlu0 %380
        %383 = vrot.lane.b32.xlu0 %v227, 12
        %v384 = vpop.permute.xlu0 %383
        %386 = vrot.lane.b32.xlu0 %v226, 4
        %v387 = vpop.permute.xlu0 %386
        %vm389 = vcmask 7168
        %v390 = vsel %vm389, %v227, %v368
        %vm391 = vcmask 39936
        %v392 = vsel %vm391, %v390, %v372
        %vm393 = vcmask 48128
        %v394 = vsel %vm393, %v392, %v375
        %vm395 = vcmask 80896
        %v396 = vsel %vm395, %v394, %v378
        %vm397 = vcmask 89088
        %v398 = vsel %vm397, %v396, %v381
        %vm399 = vcmask 121856
        %v400 = vsel %vm399, %v398, %v384
        %v401 = vsel %vm292, %v400, %v387
        %v402 = vmul.f32 %v401, %v363
        %404 = vrot.lane.b32.xlu0 %v402, 123
        %v405 = vpop.permute.xlu0 %404
        %v407 = vadd.f32 %v402, %v405
        %408 = vrot.lane.b32.xlu0 %v402, 118
        %v409 = vpop.permute.xlu0 %408
        %v411 = vadd.f32 %v407, %v409
        %412 = vrot.lane.b32.xlu0 %v402, 113
        %v413 = vpop.permute.xlu0 %412
        %v415 = vadd.f32 %v411, %v413
        %v416 = vmul.f32 %v415, 1000.0
        %vm417 = vcmask 33792
        %v418 = vsel %vm417, %v416, -inf
        %419 = vmax.xlane.f32.xlu0 %v418
        %v420 = vpop.xlane.xlu0 %419
        %v421 = vsub.f32 %v416, %v420
        %v422 = vmul.f32 %v421, 1.442695
        %v423 = vpow.pop %v422
        %v424 = vsel %vm417, %v423, 0.0
        %425 = vadd.xlane.f32.xlu0 %v424
        %v426 = vpop.xlane.xlu0 %425
        %v427 = vrcp.pop %v426
        %v428 = vmul.f32 %v423, %v427
        %430 = vrot.lane.b32.xlu0 %v428, 5
        %v431 = vpop.permute.xlu0 %430
        %433 = vrot.lane.b32.xlu0 %v428, 10
        %v434 = vpop.permute.xlu0 %433
        %436 = vrot.lane.b32.xlu0 %v428, 15
        %v437 = vpop.permute.xlu0 %436
        %v439 = vsel %vm391, %v428, %v431
        %v440 = vsel %vm395, %v439, %v434
        %v441 = vsel %vm399, %v440, %v437
        %v442 = vmul.f32 %v401, %v441
        %vm443 = vcmask 162816
        %v445 = vsel %vm443, %v442, 0
        %v448 = vsel %vm443, %v206, 0
        %v451 = vsel %vm443, %v207, 0
        %453 = vmatprep.subr.mxu0 0.0
        %454 = vmatpush1.xpose.msra.mxu0 %v448
        %455 = vmatprep.subr.mxu0 0.0
        %456 = vmatpush1.xpose.msra.mxu0 %v451
        %457 = vmatprep.subr.mxu0 0.0
        %458 = vmatpush1.xpose.msra.mxu0 0.0
        %459 = vmatprep.subr.mxu0 0.0
        %460 = vmatpush1.xpose.msra.mxu0 0.0
        %461 = vmatprep.subr.mxu0 0.0
        %462 = vmatpush1.xpose.msra.mxu0 0.0
        %463 = vmatprep.subr.mxu0 0.0
        %464 = vmatpush1.xpose.msra.mxu0 0.0
        %465 = vmatprep.subr.mxu0 0.0
        %466 = vmatpush1.xpose.msra.mxu0 0.0
        %467 = vmatprep.subr.mxu0 0.0
        %468 = vmatpush1.xpose.msra.mxu0 0.0
        %469 = vmatprep.subr.mxu0 0.0
        %470 = vmatpush1.xpose.msra.mxu0 0.0
        %471 = vmatprep.subr.mxu0 0.0
        %472 = vmatpush1.xpose.msra.mxu0 0.0
        %473 = vmatprep.subr.mxu0 0.0
        %474 = vmatpush1.xpose.msra.mxu0 0.0
        %475 = vmatprep.subr.mxu0 0.0
        %476 = vmatpush1.xpose.msra.mxu0 0.0
        %477 = vmatprep.subr.mxu0 0.0
        %478 = vmatpush1.xpose.msra.mxu0 0.0
        %479 = vmatprep.subr.mxu0 0.0
        %480 = vmatpush1.xpose.msra.mxu0 0.0
        %481 = vmatprep.subr.mxu0 0.0
        %482 = vmatpush1.xpose.msra.mxu0 0.0
        %483 = vmatprep.subr.mxu0 0.0
        %484 = vmatpush1.xpose.msra.mxu0 0.0
        %485 = vmatprep.subr.mxu0 0.0
        %486 = vmatpush1.xpose.msra.mxu0 0.0
        %487 = vmatprep.subr.mxu0 0.0
        %488 = vmatpush1.xpose.msra.mxu0 0.0
        %489 = vmatprep.subr.mxu0 0.0
        %490 = vmatpush1.xpose.msra.mxu0 0.0
        %491 = vmatprep.subr.mxu0 0.0
        %492 = vmatpush1.xpose.msra.mxu0 0.0
        %493 = vmatprep.subr.mxu0 0.0
        %494 = vmatpush1.xpose.msra.mxu0 0.0
        %495 = vmatprep.subr.mxu0 0.0
        %496 = vmatpush1.xpose.msra.mxu0 0.0
        %497 = vmatprep.subr.mxu0 0.0
        %498 = vmatpush1.xpose.msra.mxu0 0.0
        %499 = vmatprep.subr.mxu0 0.0
        %500 = vmatpush1.xpose.msra.mxu0 0.0
        %501 = vmatprep.subr.mxu0 0.0
        %502 = vmatpush1.xpose.msra.mxu0 0.0
        %503 = vmatprep.subr.mxu0 0.0
        %504 = vmatpush1.xpose.msra.mxu0 0.0
        %505 = vmatprep.subr.mxu0 0.0
        %506 = vmatpush1.xpose.msra.mxu0 0.0
        %507 = vmatprep.subr.mxu0 0.0
        %508 = vmatpush1.xpose.msra.mxu0 0.0
        %509 = vmatprep.subr.mxu0 0.0
        %510 = vmatpush1.xpose.msra.mxu0 0.0
        %511 = vmatprep.subr.mxu0 0.0
        %512 = vmatpush1.xpose.msra.mxu0 0.0
        %513 = vmatprep.subr.mxu0 0.0
        %514 = vmatpush1.xpose.msra.mxu0 0.0
        %515 = vmatprep.subr.mxu0 0.0
        %516 = vmatpush1.xpose.msra.mxu0 0.0
        %517 = vmatprep.mubr.f32.mxu0 0.0
        %518 = vmatmul.mubr.f32.gmra.mrb[0].mxu0 %v445
        %v519 = vpop.f32.mrb[0].mxu0
        %v520 = vadd.f32 0.0, %v519
        %v521 = vpop.f32.mrb[0].mxu0
        %522 = vdwg.mxu0
        %v523 = vmul.f32 %v520, 7.0
        %525 = vrot.lane.b32.xlu0 %v523, 124
        %v526 = vpop.permute.xlu0 %525
        %v528 = vmax.f32 %v523, %v526
        %529 = vrot.lane.b32.xlu0 %v523, 120
        %v530 = vpop.permute.xlu0 %529
        %v532 = vmax.f32 %v528, %v530
        %533 = vrot.lane.b32.xlu0 %v523, 116
        %v534 = vpop.permute.xlu0 %533
        %v536 = vmax.f32 %v532, %v534
        %v537 = vsub.f32 %v523, %v536
        %v538 = vmul.f32 %v537, 1.442695
        %v539 = vpow.pop %v538
        %541 = vrot.lane.b32.xlu0 %v536, 4
        %v542 = vpop.permute.xlu0 %541
        %v544 = vsub.f32 %v523, %v542
        %v545 = vmul.f32 %v544, 1.442695
        %v546 = vpow.pop %v545
        %547 = vrot.lane.b32.xlu0 %v536, 8
        %v548 = vpop.permute.xlu0 %547
        %v550 = vsub.f32 %v523, %v548
        %v551 = vmul.f32 %v550, 1.442695
        %v552 = vpow.pop %v551
        %553 = vrot.lane.b32.xlu0 %v536, 12
        %v554 = vpop.permute.xlu0 %553
        %v556 = vsub.f32 %v523, %v554
        %v557 = vmul.f32 %v556, 1.442695
        %v558 = vpow.pop %v557
        %560 = vrot.lane.b32.xlu0 %v546, 124
        %v561 = vpop.permute.xlu0 %560
        %v563 = vadd.f32 %v539, %v561
        %565 = vrot.lane.b32.xlu0 %v552, 120
        %v566 = vpop.permute.xlu0 %565
        %v568 = vadd.f32 %v563, %v566
        %570 = vrot.lane.b32.xlu0 %v558, 116
        %v571 = vpop.permute.xlu0 %570
        %v573 = vadd.f32 %v568, %v571
        %v574 = vrcp.pop %v573
        %v575 = vmul.f32 %v539, %v574
        %577 = vrot.lane.b32.xlu0 %v574, 4
        %v578 = vpop.permute.xlu0 %577
        %v580 = vmul.f32 %v546, %v578
        %581 = vrot.lane.b32.xlu0 %v574, 8
        %v582 = vpop.permute.xlu0 %581
        %v584 = vmul.f32 %v552, %v582
        %585 = vrot.lane.b32.xlu0 %v574, 12
        %v586 = vpop.permute.xlu0 %585
        %v588 = vmul.f32 %v558, %v586
        %v589 = vsel %vm286, %v575, %v580
        %v590 = vsel %vm288, %v589, %v584
        %v591 = vsel %vm290, %v590, %v588
        %v592 = vsel %vm286, %v227, %v372
        %v593 = vsel %vm288, %v592, %v378
        %v594 = vsel %vm290, %v593, %v384
        %v595 = vmul.f32 %v591, %v594
        %v597 = vsel %vm292, %v595, 0
        %599 = vmatprep.subr.mxu0 0.0
        %600 = vmatpush1.msra.mxu0 %v224
        %601 = vmatprep.subr.mxu0 0.0
        %602 = vmatpush1.msra.mxu0 %v225
        %603 = vmatprep.subr.mxu0 0.0
        %604 = vmatpush1.msra.mxu0 0.0
        %605 = vmatprep.subr.mxu0 0.0
        %606 = vmatpush1.msra.mxu0 0.0
        %607 = vmatprep.subr.mxu0 0.0
        %608 = vmatpush1.msra.mxu0 0.0
        %609 = vmatprep.subr.mxu0 0.0
        %610 = vmatpush1.msra.mxu0 0.0
        %611 = vmatprep.subr.mxu0 0.0
        %612 = vmatpush1.msra.mxu0 0.0
        %613 = vmatprep.subr.mxu0 0.0
        %614 = vmatpush1.msra.mxu0 0.0
        %615 = vmatprep.subr.mxu0 0.0
        %616 = vmatpush1.msra.mxu0 0.0
        %617 = vmatprep.subr.mxu0 0.0
        %618 = vmatpush1.msra.mxu0 0.0
        %619 = vmatprep.subr.mxu0 0.0
        %620 = vmatpush1.msra.mxu0 0.0
        %621 = vmatprep.subr.mxu0 0.0
        %622 = vmatpush1.msra.mxu0 0.0
        %623 = vmatprep.subr.mxu0 0.0
        %624 = vmatpush1.msra.mxu0 0.0
        %625 = vmatprep.subr.mxu0 0.0
        %626 = vmatpush1.msra.mxu0 0.0
        %627 = vmatprep.subr.mxu0 0.0
        %628 = vmatpush1.msra.mxu0 0.0
        %629 = vmatprep.subr.mxu0 0.0
        %630 = vmatpush1.msra.mxu0 0.0
        %631 = vmatprep.subr.mxu0 0.0
        %632 = vmatpush1.msra.mxu0 0.0
        %633 = vmatprep.subr.mxu0 0.0
        %634 = vmatpush1.msra.mxu0 0.0
        %635 = vmatprep.subr.mxu0 0.0
        %636 = vmatpush1.msra.mxu0 0.0
        %637 = vmatprep.subr.mxu0 0.0
        %638 = vmatpush1.msra.mxu0 0.0
        %639 = vmatprep.subr.mxu0 0.0
        %640 = vmatpush1.msra.mxu0 0.0
        %641 = vmatprep.subr.mxu0 0.0
        %642 = vmatpush1.msra.mxu0 0.0
        %643 = vmatprep.subr.mxu0 0.0
        %644 = vmatpush1.msra.mxu0 0.0
        %645 = vmatprep.subr.mxu0 0.0
        %646 = vmatpush1.msra.mxu0 0.0
        %647 = vmatprep.subr.mxu0 0.0
        %648 = vmatpush1.msra.mxu0 0.0
        %649 = vmatprep.subr.mxu0 0.0
        %650 = vmatpush1.msra.mxu0 0.0
        %651 = vmatprep.subr.mxu0 0.0
        %652 = vmatpush1.msra.mxu0 0.0
        %653 = vmatprep.subr.mxu0 0.0
        %654 = vmatpush1.msra.mxu0 0.0
        %655 = vmatprep.subr.mxu0 0.0
        %656 = vmatpush1.msra.mxu0 0.0
        %657 = vmatprep.subr.mxu0 0.0
        %658 = vmatpush1.msra.mxu0 0.0
        %659 = vmatprep.subr.mxu0 0.0
        %660 = vmatpush1.msra.mxu0 0.0
        %661 = vmatprep.subr.mxu0 0.0
        %662 = vmatpush1.msra.mxu0 0.0
        %663 = vmatprep.mubr.f32.mxu0 0.0
        %664 = vmatmul.mubr.f32.gmra.mrb[0].mxu0 %v597
        %v665 = vpop.f32.mrb[0].mxu0
        %v666 = vadd.f32 0.0, %v665
        %v667 = vpop.f32.mrb[0].mxu0
        %668 = vdwg.mxu0
        %669 = vst.msk [vmem:[%s181] sm:$0x3] %vm229, %v666
        %s670 = scalar_lea.vmem %s163, 2 [#allocation4]
        %v671 = vld [vmem:[%s670] sm:$0x3]
        %v672 = vmul.f32 %v671, 1000.0
        %v673 = vsel %vm229, %v672, -inf
        %674 = vmax.xlane.f32.xlu0 %v673
        %v675 = vpop.xlane.xlu0 %674
        %v676 = vsub.f32 %v672, %v675
        %v677 = vmul.f32 %v676, 1.442695
        %v678 = vpow.pop %v677
        %v679 = vsel %vm229, %v678, 0.0
        %680 = vadd.xlane.f32.xlu0 %v679
        %v681 = vpop.xlane.xlu0 %680
        %v682 = vrcp.pop %v681
        %v683 = vmul.f32 %v678, %v682
        %v684 = vsub.f32 0.0, %v672
        %v685 = vsel %vm229, %v684, -inf
        %686 = vmax.xlane.f32.xlu0 %v685
        %v687 = vpop.xlane.xlu0 %686
        %v688 = vsub.f32 %v684, %v687
        %v689 = vmul.f32 %v688, 1.442695
        %v690 = vpow.pop %v689
        %v691 = vsel %vm229, %v690, 0.0
        %692 = vadd.xlane.f32.xlu0 %v691
        %v693 = vpop.xlane.xlu0 %692
        %v694 = vrcp.pop %v693
        %v695 = vmul.f32 %v690, %v694
        %697 = vset.pattern.permute.xlu0 0
        %698 = vperm.xlu0 %697, %v695
        %v699 = vpop.permute.xlu0 %698
        %v701 = vmul.f32 %v699, %v683
        %702 = vset.pattern.permute.xlu0 1
        %703 = vperm.xlu0 %702, %v695
        %v704 = vpop.permute.xlu0 %703
        %v706 = vmul.f32 %v704, %v683
        %707 = vset.pattern.permute.xlu0 2
        %708 = vperm.xlu0 %707, %v695
        %v709 = vpop.permute.xlu0 %708
        %v711 = vmul.f32 %v709, %v683
        %712 = vset.pattern.permute.xlu0 3
        %713 = vperm.xlu0 %712, %v695
        %v714 = vpop.permute.xlu0 %713
        %v716 = vmul.f32 %v714, %v683
        %718 = vrot.lane.b32.xlu0 %v706, 4
        %v719 = vpop.permute.xlu0 %718
        %722 = vrot.lane.b32.xlu0 %v711, 8
        %v723 = vpop.permute.xlu0 %722
        %726 = vrot.lane.b32.xlu0 %v716, 12
        %v727 = vpop.permute.xlu0 %726
        %v729 = vsel %vm286, %v701, %v719
        %v730 = vsel %vm288, %v729, %v723
        %v731 = vsel %vm290, %v730, %v727
        %v733 = vsel %vm292, %v731, 0
        %735 = vmatprep.subr.mxu0 0.0
        %736 = vmatpush1.msra.mxu0 %v206
        %737 = vmatprep.subr.mxu0 0.0
        %738 = vmatpush1.msra.mxu0 %v207
        %739 = vmatprep.subr.mxu0 0.0
        %740 = vmatpush1.msra.mxu0 0.0
        %741 = vmatprep.subr.mxu0 0.0
        %742 = vmatpush1.msra.mxu0 0.0
        %743 = vmatprep.subr.mxu0 0.0
        %744 = vmatpush1.msra.mxu0 0.0
        %745 = vmatprep.subr.mxu0 0.0
        %746 = vmatpush1.msra.mxu0 0.0
        %747 = vmatprep.subr.mxu0 0.0
        %748 = vmatpush1.msra.mxu0 0.0
        %749 = vmatprep.subr.mxu0 0.0
        %750 = vmatpush1.msra.mxu0 0.0
        %751 = vmatprep.subr.mxu0 0.0
        %752 = vmatpush1.msra.mxu0 0.0
        %753 = vmatprep.subr.mxu0 0.0
        %754 = vmatpush1.msra.mxu0 0.0
        %755 = vmatprep.subr.mxu0 0.0
        %756 = vmatpush1.msra.mxu0 0.0
        %757 = vmatprep.subr.mxu0 0.0
        %758 = vmatpush1.msra.mxu0 0.0
        %759 = vmatprep.subr.mxu0 0.0
        %760 = vmatpush1.msra.mxu0 0.0
        %761 = vmatprep.subr.mxu0 0.0
        %762 = vmatpush1.msra.mxu0 0.0
        %763 = vmatprep.subr.mxu0 0.0
        %764 = vmatpush1.msra.mxu0 0.0
        %765 = vmatprep.subr.mxu0 0.0
        %766 = vmatpush1.msra.mxu0 0.0
        %767 = vmatprep.subr.mxu0 0.0
        %768 = vmatpush1.msra.mxu0 0.0
        %769 = vmatprep.subr.mxu0 0.0
        %770 = vmatpush1.msra.mxu0 0.0
        %771 = vmatprep.subr.mxu0 0.0
        %772 = vmatpush1.msra.mxu0 0.0
        %773 = vmatprep.subr.mxu0 0.0
        %774 = vmatpush1.msra.mxu0 0.0
        %775 = vmatprep.subr.mxu0 0.0
        %776 = vmatpush1.msra.mxu0 0.0
        %777 = vmatprep.subr.mxu0 0.0
        %778 = vmatpush1.msra.mxu0 0.0
        %779 = vmatprep.subr.mxu0 0.0
        %780 = vmatpush1.msra.mxu0 0.0
        %781 = vmatprep.subr.mxu0 0.0
        %782 = vmatpush1.msra.mxu0 0.0
        %783 = vmatprep.subr.mxu0 0.0
        %784 = vmatpush1.msra.mxu0 0.0
        %785 = vmatprep.subr.mxu0 0.0
        %786 = vmatpush1.msra.mxu0 0.0
        %787 = vmatprep.subr.mxu0 0.0
        %788 = vmatpush1.msra.mxu0 0.0
        %789 = vmatprep.subr.mxu0 0.0
        %790 = vmatpush1.msra.mxu0 0.0
        %791 = vmatprep.subr.mxu0 0.0
        %792 = vmatpush1.msra.mxu0 0.0
        %793 = vmatprep.subr.mxu0 0.0
        %794 = vmatpush1.msra.mxu0 0.0
        %795 = vmatprep.subr.mxu0 0.0
        %796 = vmatpush1.msra.mxu0 0.0
        %797 = vmatprep.subr.mxu0 0.0
        %798 = vmatpush1.msra.mxu0 0.0
        %799 = vmatprep.mubr.f32.mxu0 0.0
        %800 = vmatmul.mubr.f32.gmra.mrb[0].mxu0 %v733
        %v801 = vpop.f32.mrb[0].mxu0
        %v802 = vadd.f32 0.0, %v801
        %v803 = vpop.f32.mrb[0].mxu0
        %804 = vdwg.mxu0
        %806 = vrot.lane.b32.xlu0 %v591, 1
        %v807 = vpop.permute.xlu0 %806
        %810 = vrot.lane.b32.xlu0 %v671, 4
        %v811 = vpop.permute.xlu0 %810
        %813 = vrot.lane.b32.xlu0 %v591, 2
        %v814 = vpop.permute.xlu0 %813
        %816 = vrot.lane.b32.xlu0 %v671, 8
        %v817 = vpop.permute.xlu0 %816
        %819 = vrot.lane.b32.xlu0 %v591, 3
        %v820 = vpop.permute.xlu0 %819
        %822 = vrot.lane.b32.xlu0 %v671, 12
        %v823 = vpop.permute.xlu0 %822
        %825 = vrot.lane.b32.xlu0 %v591, 4
        %v826 = vpop.permute.xlu0 %825
        %v828 = vsel %vm389, %v671, %v807
        %v829 = vsel %vm391, %v828, %v811
        %v830 = vsel %vm393, %v829, %v814
        %v831 = vsel %vm395, %v830, %v817
        %v832 = vsel %vm397, %v831, %v820
        %v833 = vsel %vm399, %v832, %v823
        %v834 = vsel %vm292, %v833, %v826
        %v835 = vmul.f32 %v834, %v802
        %837 = vrot.lane.b32.xlu0 %v835, 123
        %v838 = vpop.permute.xlu0 %837
        %v840 = vadd.f32 %v835, %v838
        %841 = vrot.lane.b32.xlu0 %v835, 118
        %v842 = vpop.permute.xlu0 %841
        %v844 = vadd.f32 %v840, %v842
        %845 = vrot.lane.b32.xlu0 %v835, 113
        %v846 = vpop.permute.xlu0 %845
        %v848 = vadd.f32 %v844, %v846
        %v849 = vmul.f32 %v848, 1000.0
        %v850 = vsel %vm417, %v849, -inf
        %851 = vmax.xlane.f32.xlu0 %v850
        %v852 = vpop.xlane.xlu0 %851
        %v853 = vsub.f32 %v849, %v852
        %v854 = vmul.f32 %v853, 1.442695
        %v855 = vpow.pop %v854
        %v856 = vsel %vm417, %v855, 0.0
        %857 = vadd.xlane.f32.xlu0 %v856
        %v858 = vpop.xlane.xlu0 %857
        %v859 = vrcp.pop %v858
        %v860 = vmul.f32 %v855, %v859
        %862 = vrot.lane.b32.xlu0 %v860, 5
        %v863 = vpop.permute.xlu0 %862
        %865 = vrot.lane.b32.xlu0 %v860, 10
        %v866 = vpop.permute.xlu0 %865
        %868 = vrot.lane.b32.xlu0 %v860, 15
        %v869 = vpop.permute.xlu0 %868
        %v871 = vsel %vm391, %v860, %v863
        %v872 = vsel %vm395, %v871, %v866
        %v873 = vsel %vm399, %v872, %v869
        %v874 = vmul.f32 %v834, %v873
        %v876 = vsel %vm443, %v874, 0
        %878 = vmatprep.subr.mxu0 0.0
        %879 = vmatpush1.xpose.msra.mxu0 %v448
        %880 = vmatprep.subr.mxu0 0.0
        %881 = vmatpush1.xpose.msra.mxu0 %v451
        %882 = vmatprep.subr.mxu0 0.0
        %883 = vmatpush1.xpose.msra.mxu0 0.0
        %884 = vmatprep.subr.mxu0 0.0
        %885 = vmatpush1.xpose.msra.mxu0 0.0
        %886 = vmatprep.subr.mxu0 0.0
        %887 = vmatpush1.xpose.msra.mxu0 0.0
        %888 = vmatprep.subr.mxu0 0.0
        %889 = vmatpush1.xpose.msra.mxu0 0.0
        %890 = vmatprep.subr.mxu0 0.0
        %891 = vmatpush1.xpose.msra.mxu0 0.0
        %892 = vmatprep.subr.mxu0 0.0
        %893 = vmatpush1.xpose.msra.mxu0 0.0
        %894 = vmatprep.subr.mxu0 0.0
        %895 = vmatpush1.xpose.msra.mxu0 0.0
        %896 = vmatprep.subr.mxu0 0.0
        %897 = vmatpush1.xpose.msra.mxu0 0.0
        %898 = vmatprep.subr.mxu0 0.0
        %899 = vmatpush1.xpose.msra.mxu0 0.0
        %900 = vmatprep.subr.mxu0 0.0
        %901 = vmatpush1.xpose.msra.mxu0 0.0
        %902 = vmatprep.subr.mxu0 0.0
        %903 = vmatpush1.xpose.msra.mxu0 0.0
        %904 = vmatprep.subr.mxu0 0.0
        %905 = vmatpush1.xpose.msra.mxu0 0.0
        %906 = vmatprep.subr.mxu0 0.0
        %907 = vmatpush1.xpose.msra.mxu0 0.0
        %908 = vmatprep.subr.mxu0 0.0
        %909 = vmatpush1.xpose.msra.mxu0 0.0
        %910 = vmatprep.subr.mxu0 0.0
        %911 = vmatpush1.xpose.msra.mxu0 0.0
        %912 = vmatprep.subr.mxu0 0.0
        %913 = vmatpush1.xpose.msra.mxu0 0.0
        %914 = vmatprep.subr.mxu0 0.0
        %915 = vmatpush1.xpose.msra.mxu0 0.0
        %916 = vmatprep.subr.mxu0 0.0
        %917 = vmatpush1.xpose.msra.mxu0 0.0
        %918 = vmatprep.subr.mxu0 0.0
        %919 = vmatpush1.xpose.msra.mxu0 0.0
        %920 = vmatprep.subr.mxu0 0.0
        %921 = vmatpush1.xpose.msra.mxu0 0.0
        %922 = vmatprep.subr.mxu0 0.0
        %923 = vmatpush1.xpose.msra.mxu0 0.0
        %924 = vmatprep.subr.mxu0 0.0
        %925 = vmatpush1.xpose.msra.mxu0 0.0
        %926 = vmatprep.subr.mxu0 0.0
        %927 = vmatpush1.xpose.msra.mxu0 0.0
        %928 = vmatprep.subr.mxu0 0.0
        %929 = vmatpush1.xpose.msra.mxu0 0.0
        %930 = vmatprep.subr.mxu0 0.0
        %931 = vmatpush1.xpose.msra.mxu0 0.0
        %932 = vmatprep.subr.mxu0 0.0
        %933 = vmatpush1.xpose.msra.mxu0 0.0
        %934 = vmatprep.subr.mxu0 0.0
        %935 = vmatpush1.xpose.msra.mxu0 0.0
        %936 = vmatprep.subr.mxu0 0.0
        %937 = vmatpush1.xpose.msra.mxu0 0.0
        %938 = vmatprep.subr.mxu0 0.0
        %939 = vmatpush1.xpose.msra.mxu0 0.0
        %940 = vmatprep.subr.mxu0 0.0
        %941 = vmatpush1.xpose.msra.mxu0 0.0
        %942 = vmatprep.mubr.f32.mxu0 0.0
        %943 = vmatmul.mubr.f32.gmra.mrb[0].mxu0 %v876
        %v944 = vpop.f32.mrb[0].mxu0
        %v945 = vadd.f32 0.0, %v944
        %v946 = vpop.f32.mrb[0].mxu0
        %947 = vdwg.mxu0
        %v948 = vmul.f32 %v945, 7.0
        %950 = vrot.lane.b32.xlu0 %v948, 124
        %v951 = vpop.permute.xlu0 %950
        %v953 = vmax.f32 %v948, %v951
        %954 = vrot.lane.b32.xlu0 %v948, 120
        %v955 = vpop.permute.xlu0 %954
        %v957 = vmax.f32 %v953, %v955
        %958 = vrot.lane.b32.xlu0 %v948, 116
        %v959 = vpop.permute.xlu0 %958
        %v961 = vmax.f32 %v957, %v959
        %v962 = vsub.f32 %v948, %v961
        %v963 = vmul.f32 %v962, 1.442695
        %v964 = vpow.pop %v963
        %966 = vrot.lane.b32.xlu0 %v961, 4
        %v967 = vpop.permute.xlu0 %966
        %v969 = vsub.f32 %v948, %v967
        %v970 = vmul.f32 %v969, 1.442695
        %v971 = vpow.pop %v970
        %972 = vrot.lane.b32.xlu0 %v961, 8
        %v973 = vpop.permute.xlu0 %972
        %v975 = vsub.f32 %v948, %v973
        %v976 = vmul.f32 %v975, 1.442695
        %v977 = vpow.pop %v976
        %978 = vrot.lane.b32.xlu0 %v961, 12
        %v979 = vpop.permute.xlu0 %978
        %v981 = vsub.f32 %v948, %v979
        %v982 = vmul.f32 %v981, 1.442695
        %v983 = vpow.pop %v982
        %985 = vrot.lane.b32.xlu0 %v971, 124
        %v986 = vpop.permute.xlu0 %985
        %v988 = vadd.f32 %v964, %v986
        %990 = vrot.lane.b32.xlu0 %v977, 120
        %v991 = vpop.permute.xlu0 %990
        %v993 = vadd.f32 %v988, %v991
        %995 = vrot.lane.b32.xlu0 %v983, 116
        %v996 = vpop.permute.xlu0 %995
        %v998 = vadd.f32 %v993, %v996
        %v999 = vrcp.pop %v998
        %v1000 = vmul.f32 %v964, %v999
        %1002 = vrot.lane.b32.xlu0 %v999, 4
        %v1003 = vpop.permute.xlu0 %1002
        %v1005 = vmul.f32 %v971, %v1003
        %1006 = vrot.lane.b32.xlu0 %v999, 8
        %v1007 = vpop.permute.xlu0 %1006
        %v1009 = vmul.f32 %v977, %v1007
        %1010 = vrot.lane.b32.xlu0 %v999, 12
        %v1011 = vpop.permute.xlu0 %1010
        %v1013 = vmul.f32 %v983, %v1011
        %v1014 = vsel %vm286, %v1000, %v1005
        %v1015 = vsel %vm288, %v1014, %v1009
        %v1016 = vsel %vm290, %v1015, %v1013
        %v1017 = vsel %vm286, %v671, %v811
        %v1018 = vsel %vm288, %v1017, %v817
        %v1019 = vsel %vm290, %v1018, %v823
        %v1020 = vmul.f32 %v1016, %v1019
        %v1022 = vsel %vm292, %v1020, 0
        %1024 = vmatprep.subr.mxu0 0.0
        %1025 = vmatpush1.msra.mxu0 %v224
        %1026 = vmatprep.subr.mxu0 0.0
        %1027 = vmatpush1.msra.mxu0 %v225
        %1028 = vmatprep.subr.mxu0 0.0
        %1029 = vmatpush1.msra.mxu0 0.0
        %1030 = vmatprep.subr.mxu0 0.0
        %1031 = vmatpush1.msra.mxu0 0.0
        %1032 = vmatprep.subr.mxu0 0.0
        %1033 = vmatpush1.msra.mxu0 0.0
        %1034 = vmatprep.subr.mxu0 0.0
        %1035 = vmatpush1.msra.mxu0 0.0
        %1036 = vmatprep.subr.mxu0 0.0
        %1037 = vmatpush1.msra.mxu0 0.0
        %1038 = vmatprep.subr.mxu0 0.0
        %1039 = vmatpush1.msra.mxu0 0.0
        %1040 = vmatprep.subr.mxu0 0.0
        %1041 = vmatpush1.msra.mxu0 0.0
        %1042 = vmatprep.subr.mxu0 0.0
        %1043 = vmatpush1.msra.mxu0 0.0
        %1044 = vmatprep.subr.mxu0 0.0
        %1045 = vmatpush1.msra.mxu0 0.0
        %1046 = vmatprep.subr.mxu0 0.0
        %1047 = vmatpush1.msra.mxu0 0.0
        %1048 = vmatprep.subr.mxu0 0.0
        %1049 = vmatpush1.msra.mxu0 0.0
        %1050 = vmatprep.subr.mxu0 0.0
        %1051 = vmatpush1.msra.mxu0 0.0
        %1052 = vmatprep.subr.mxu0 0.0
        %1053 = vmatpush1.msra.mxu0 0.0
        %1054 = vmatprep.subr.mxu0 0.0
        %1055 = vmatpush1.msra.mxu0 0.0
        %1056 = vmatprep.subr.mxu0 0.0
        %1057 = vmatpush1.msra.mxu0 0.0
        %1058 = vmatprep.subr.mxu0 0.0
        %1059 = vmatpush1.msra.mxu0 0.0
        %1060 = vmatprep.subr.mxu0 0.0
        %1061 = vmatpush1.msra.mxu0 0.0
        %1062 = vmatprep.subr.mxu0 0.0
        %1063 = vmatpush1.msra.mxu0 0.0
        %1064 = vmatprep.subr.mxu0 0.0
        %1065 = vmatpush1.msra.mxu0 0.0
        %1066 = vmatprep.subr.mxu0 0.0
        %1067 = vmatpush1.msra.mxu0 0.0
        %1068 = vmatprep.subr.mxu0 0.0
        %1069 = vmatpush1.msra.mxu0 0.0
        %1070 = vmatprep.subr.mxu0 0.0
        %1071 = vmatpush1.msra.mxu0 0.0
        %1072 = vmatprep.subr.mxu0 0.0
        %1073 = vmatpush1.msra.mxu0 0.0
        %1074 = vmatprep.subr.mxu0 0.0
        %1075 = vmatpush1.msra.mxu0 0.0
        %1076 = vmatprep.subr.mxu0 0.0
        %1077 = vmatpush1.msra.mxu0 0.0
        %1078 = vmatprep.subr.mxu0 0.0
        %1079 = vmatpush1.msra.mxu0 0.0
        %1080 = vmatprep.subr.mxu0 0.0
        %1081 = vmatpush1.msra.mxu0 0.0
        %1082 = vmatprep.subr.mxu0 0.0
        %1083 = vmatpush1.msra.mxu0 0.0
        %1084 = vmatprep.subr.mxu0 0.0
        %1085 = vmatpush1.msra.mxu0 0.0
        %1086 = vmatprep.subr.mxu0 0.0
        %1087 = vmatpush1.msra.mxu0 0.0
        %1088 = vmatprep.mubr.f32.mxu0 0.0
        %1089 = vmatmul.mubr.f32.gmra.mrb[0].mxu0 %v1022
        %v1090 = vpop.f32.mrb[0].mxu0
        %v1091 = vadd.f32 0.0, %v1090
        %v1092 = vpop.f32.mrb[0].mxu0
        %1093 = vdwg.mxu0
        %s1094 = scalar_lea.vmem %s181, 2 [#allocation7]
        %1095 = vst.msk [vmem:[%s1094] sm:$0x3] %vm229, %v1091
        %s1096 = scalar_lea.vmem %s163, 4 [#allocation4]
        %v1097 = vld [vmem:[%s1096] sm:$0x3]
        %v1098 = vmul.f32 %v1097, 1000.0
        %v1099 = vsel %vm229, %v1098, -inf
        %1100 = vmax.xlane.f32.xlu0 %v1099
        %v1101 = vpop.xlane.xlu0 %1100
        %v1102 = vsub.f32 %v1098, %v1101
        %v1103 = vmul.f32 %v1102, 1.442695
        %v1104 = vpow.pop %v1103
        %v1105 = vsel %vm229, %v1104, 0.0
        %1106 = vadd.xlane.f32.xlu0 %v1105
        %v1107 = vpop.xlane.xlu0 %1106
        %v1108 = vrcp.pop %v1107
        %v1109 = vmul.f32 %v1104, %v1108
        %v1110 = vsub.f32 0.0, %v1098
        %v1111 = vsel %vm229, %v1110, -inf
        %1112 = vmax.xlane.f32.xlu0 %v1111
        %v1113 = vpop.xlane.xlu0 %1112
        %v1114 = vsub.f32 %v1110, %v1113
        %v1115 = vmul.f32 %v1114, 1.442695
        %v1116 = vpow.pop %v1115
        %v1117 = vsel %vm229, %v1116, 0.0
        %1118 = vadd.xlane.f32.xlu0 %v1117
        %v1119 = vpop.xlane.xlu0 %1118
        %v1120 = vrcp.pop %v1119
        %v1121 = vmul.f32 %v1116, %v1120
        %1123 = vset.pattern.permute.xlu0 0
        %1124 = vperm.xlu0 %1123, %v1121
        %v1125 = vpop.permute.xlu0 %1124
        %v1127 = vmul.f32 %v1125, %v1109
        %1128 = vset.pattern.permute.xlu0 1
        %1129 = vperm.xlu0 %1128, %v1121
        %v1130 = vpop.permute.xlu0 %1129
        %v1132 = vmul.f32 %v1130, %v1109
        %1133 = vset.pattern.permute.xlu0 2
        %1134 = vperm.xlu0 %1133, %v1121
        %v1135 = vpop.permute.xlu0 %1134
        %v1137 = vmul.f32 %v1135, %v1109
        %1138 = vset.pattern.permute.xlu0 3
        %1139 = vperm.xlu0 %1138, %v1121
        %v1140 = vpop.permute.xlu0 %1139
        %v1142 = vmul.f32 %v1140, %v1109
        %1144 = vrot.lane.b32.xlu0 %v1132, 4
        %v1145 = vpop.permute.xlu0 %1144
        %1148 = vrot.lane.b32.xlu0 %v1137, 8
        %v1149 = vpop.permute.xlu0 %1148
        %1152 = vrot.lane.b32.xlu0 %v1142, 12
        %v1153 = vpop.permute.xlu0 %1152
        %v1155 = vsel %vm286, %v1127, %v1145
        %v1156 = vsel %vm288, %v1155, %v1149
        %v1157 = vsel %vm290, %v1156, %v1153
        %v1159 = vsel %vm292, %v1157, 0
        %1161 = vmatprep.subr.mxu0 0.0
        %1162 = vmatpush1.msra.mxu0 %v206
        %1163 = vmatprep.subr.mxu0 0.0
        %1164 = vmatpush1.msra.mxu0 %v207
        %1165 = vmatprep.subr.mxu0 0.0
        %1166 = vmatpush1.msra.mxu0 0.0
        %1167 = vmatprep.subr.mxu0 0.0
        %1168 = vmatpush1.msra.mxu0 0.0
        %1169 = vmatprep.subr.mxu0 0.0
        %1170 = vmatpush1.msra.mxu0 0.0
        %1171 = vmatprep.subr.mxu0 0.0
        %1172 = vmatpush1.msra.mxu0 0.0
        %1173 = vmatprep.subr.mxu0 0.0
        %1174 = vmatpush1.msra.mxu0 0.0
        %1175 = vmatprep.subr.mxu0 0.0
        %1176 = vmatpush1.msra.mxu0 0.0
        %1177 = vmatprep.subr.mxu0 0.0
        %1178 = vmatpush1.msra.mxu0 0.0
        %1179 = vmatprep.subr.mxu0 0.0
        %1180 = vmatpush1.msra.mxu0 0.0
        %1181 = vmatprep.subr.mxu0 0.0
        %1182 = vmatpush1.msra.mxu0 0.0
        %1183 = vmatprep.subr.mxu0 0.0
        %1184 = vmatpush1.msra.mxu0 0.0
        %1185 = vmatprep.subr.mxu0 0.0
        %1186 = vmatpush1.msra.mxu0 0.0
        %1187 = vmatprep.subr.mxu0 0.0
        %1188 = vmatpush1.msra.mxu0 0.0
        %1189 = vmatprep.subr.mxu0 0.0
        %1190 = vmatpush1.msra.mxu0 0.0
        %1191 = vmatprep.subr.mxu0 0.0
        %1192 = vmatpush1.msra.mxu0 0.0
        %1193 = vmatprep.subr.mxu0 0.0
        %1194 = vmatpush1.msra.mxu0 0.0
        %1195 = vmatprep.subr.mxu0 0.0
        %1196 = vmatpush1.msra.mxu0 0.0
        %1197 = vmatprep.subr.mxu0 0.0
        %1198 = vmatpush1.msra.mxu0 0.0
        %1199 = vmatprep.subr.mxu0 0.0
        %1200 = vmatpush1.msra.mxu0 0.0
        %1201 = vmatprep.subr.mxu0 0.0
        %1202 = vmatpush1.msra.mxu0 0.0
        %1203 = vmatprep.subr.mxu0 0.0
        %1204 = vmatpush1.msra.mxu0 0.0
        %1205 = vmatprep.subr.mxu0 0.0
        %1206 = vmatpush1.msra.mxu0 0.0
        %1207 = vmatprep.subr.mxu0 0.0
        %1208 = vmatpush1.msra.mxu0 0.0
        %1209 = vmatprep.subr.mxu0 0.0
        %1210 = vmatpush1.msra.mxu0 0.0
        %1211 = vmatprep.subr.mxu0 0.0
        %1212 = vmatpush1.msra.mxu0 0.0
        %1213 = vmatprep.subr.mxu0 0.0
        %1214 = vmatpush1.msra.mxu0 0.0
        %1215 = vmatprep.subr.mxu0 0.0
        %1216 = vmatpush1.msra.mxu0 0.0
        %1217 = vmatprep.subr.mxu0 0.0
        %1218 = vmatpush1.msra.mxu0 0.0
        %1219 = vmatprep.subr.mxu0 0.0
        %1220 = vmatpush1.msra.mxu0 0.0
        %1221 = vmatprep.subr.mxu0 0.0
        %1222 = vmatpush1.msra.mxu0 0.0
        %1223 = vmatprep.subr.mxu0 0.0
        %1224 = vmatpush1.msra.mxu0 0.0
        %1225 = vmatprep.mubr.f32.mxu0 0.0
        %1226 = vmatmul.mubr.f32.gmra.mrb[0].mxu0 %v1159
        %v1227 = vpop.f32.mrb[0].mxu0
        %v1228 = vadd.f32 0.0, %v1227
        %v1229 = vpop.f32.mrb[0].mxu0
        %1230 = vdwg.mxu0
        %1232 = vrot.lane.b32.xlu0 %v1016, 1
        %v1233 = vpop.permute.xlu0 %1232
        %1236 = vrot.lane.b32.xlu0 %v1097, 4
        %v1237 = vpop.permute.xlu0 %1236
        %1239 = vrot.lane.b32.xlu0 %v1016, 2
        %v1240 = vpop.permute.xlu0 %1239
        %1242 = vrot.lane.b32.xlu0 %v1097, 8
        %v1243 = vpop.permute.xlu0 %1242
        %1245 = vrot.lane.b32.xlu0 %v1016, 3
        %v1246 = vpop.permute.xlu0 %1245
        %1248 = vrot.lane.b32.xlu0 %v1097, 12
        %v1249 = vpop.permute.xlu0 %1248
        %1251 = vrot.lane.b32.xlu0 %v1016, 4
        %v1252 = vpop.permute.xlu0 %1251
        %v1254 = vsel %vm389, %v1097, %v1233
        %v1255 = vsel %vm391, %v1254, %v1237
        %v1256 = vsel %vm393, %v1255, %v1240
        %v1257 = vsel %vm395, %v1256, %v1243
        %v1258 = vsel %vm397, %v1257, %v1246
        %v1259 = vsel %vm399, %v1258, %v1249
        %v1260 = vsel %vm292, %v1259, %v1252
        %v1261 = vmul.f32 %v1260, %v1228
        %1263 = vrot.lane.b32.xlu0 %v1261, 123
        %v1264 = vpop.permute.xlu0 %1263
        %v1266 = vadd.f32 %v1261, %v1264
        %1267 = vrot.lane.b32.xlu0 %v1261, 118
        %v1268 = vpop.permute.xlu0 %1267
        %v1270 = vadd.f32 %v1266, %v1268
        %1271 = vrot.lane.b32.xlu0 %v1261, 113
        %v1272 = vpop.permute.xlu0 %1271
        %v1274 = vadd.f32 %v1270, %v1272
        %v1275 = vmul.f32 %v1274, 1000.0
        %v1276 = vsel %vm417, %v1275, -inf
        %1277 = vmax.xlane.f32.xlu0 %v1276
        %v1278 = vpop.xlane.xlu0 %1277
        %v1279 = vsub.f32 %v1275, %v1278
        %v1280 = vmul.f32 %v1279, 1.442695
        %v1281 = vpow.pop %v1280
        %v1282 = vsel %vm417, %v1281, 0.0
        %1283 = vadd.xlane.f32.xlu0 %v1282
        %v1284 = vpop.xlane.xlu0 %1283
        %v1285 = vrcp.pop %v1284
        %v1286 = vmul.f32 %v1281, %v1285
        %1288 = vrot.lane.b32.xlu0 %v1286, 5
        %v1289 = vpop.permute.xlu0 %1288
        %1291 = vrot.lane.b32.xlu0 %v1286, 10
        %v1292 = vpop.permute.xlu0 %1291
        %1294 = vrot.lane.b32.xlu0 %v1286, 15
        %v1295 = vpop.permute.xlu0 %1294
        %v1297 = vsel %vm391, %v1286, %v1289
        %v1298 = vsel %vm395, %v1297, %v1292
        %v1299 = vsel %vm399, %v1298, %v1295
        %v1300 = vmul.f32 %v1260, %v1299
        %v1302 = vsel %vm443, %v1300, 0
        %1304 = vmatprep.subr.mxu0 0.0
        %1305 = vmatpush1.xpose.msra.mxu0 %v448
        %1306 = vmatprep.subr.mxu0 0.0
        %1307 = vmatpush1.xpose.msra.mxu0 %v451
        %1308 = vmatprep.subr.mxu0 0.0
        %1309 = vmatpush1.xpose.msra.mxu0 0.0
        %1310 = vmatprep.subr.mxu0 0.0
        %1311 = vmatpush1.xpose.msra.mxu0 0.0
        %1312 = vmatprep.subr.mxu0 0.0
        %1313 = vmatpush1.xpose.msra.mxu0 0.0
        %1314 = vmatprep.subr.mxu0 0.0
        %1315 = vmatpush1.xpose.msra.mxu0 0.0
        %1316 = vmatprep.subr.mxu0 0.0
        %1317 = vmatpush1.xpose.msra.mxu0 0.0
        %1318 = vmatprep.subr.mxu0 0.0
        %1319 = vmatpush1.xpose.msra.mxu0 0.0
        %1320 = vmatprep.subr.mxu0 0.0
        %1321 = vmatpush1.xpose.msra.mxu0 0.0
        %1322 = vmatprep.subr.mxu0 0.0
        %1323 = vmatpush1.xpose.msra.mxu0 0.0
        %1324 = vmatprep.subr.mxu0 0.0
        %1325 = vmatpush1.xpose.msra.mxu0 0.0
        %1326 = vmatprep.subr.mxu0 0.0
        %1327 = vmatpush1.xpose.msra.mxu0 0.0
        %1328 = vmatprep.subr.mxu0 0.0
        %1329 = vmatpush1.xpose.msra.mxu0 0.0
        %1330 = vmatprep.subr.mxu0 0.0
        %1331 = vmatpush1.xpose.msra.mxu0 0.0
        %1332 = vmatprep.subr.mxu0 0.0
        %1333 = vmatpush1.xpose.msra.mxu0 0.0
        %1334 = vmatprep.subr.mxu0 0.0
        %1335 = vmatpush1.xpose.msra.mxu0 0.0
        %1336 = vmatprep.subr.mxu0 0.0
        %1337 = vmatpush1.xpose.msra.mxu0 0.0
        %1338 = vmatprep.subr.mxu0 0.0
        %1339 = vmatpush1.xpose.msra.mxu0 0.0
        %1340 = vmatprep.subr.mxu0 0.0
        %1341 = vmatpush1.xpose.msra.mxu0 0.0
        %1342 = vmatprep.subr.mxu0 0.0
        %1343 = vmatpush1.xpose.msra.mxu0 0.0
        %1344 = vmatprep.subr.mxu0 0.0
        %1345 = vmatpush1.xpose.msra.mxu0 0.0
        %1346 = vmatprep.subr.mxu0 0.0
        %1347 = vmatpush1.xpose.msra.mxu0 0.0
        %1348 = vmatprep.subr.mxu0 0.0
        %1349 = vmatpush1.xpose.msra.mxu0 0.0
        %1350 = vmatprep.subr.mxu0 0.0
        %1351 = vmatpush1.xpose.msra.mxu0 0.0
        %1352 = vmatprep.subr.mxu0 0.0
        %1353 = vmatpush1.xpose.msra.mxu0 0.0
        %1354 = vmatprep.subr.mxu0 0.0
        %1355 = vmatpush1.xpose.msra.mxu0 0.0
        %1356 = vmatprep.subr.mxu0 0.0
        %1357 = vmatpush1.xpose.msra.mxu0 0.0
        %1358 = vmatprep.subr.mxu0 0.0
        %1359 = vmatpush1.xpose.msra.mxu0 0.0
        %1360 = vmatprep.subr.mxu0 0.0
        %1361 = vmatpush1.xpose.msra.mxu0 0.0
        %1362 = vmatprep.subr.mxu0 0.0
        %1363 = vmatpush1.xpose.msra.mxu0 0.0
        %1364 = vmatprep.subr.mxu0 0.0
        %1365 = vmatpush1.xpose.msra.mxu0 0.0
        %1366 = vmatprep.subr.mxu0 0.0
        %1367 = vmatpush1.xpose.msra.mxu0 0.0
        %1368 = vmatprep.mubr.f32.mxu0 0.0
        %1369 = vmatmul.mubr.f32.gmra.mrb[0].mxu0 %v1302
        %v1370 = vpop.f32.mrb[0].mxu0
        %v1371 = vadd.f32 0.0, %v1370
        %v1372 = vpop.f32.mrb[0].mxu0
        %1373 = vdwg.mxu0
        %v1374 = vmul.f32 %v1371, 7.0
        %1376 = vrot.lane.b32.xlu0 %v1374, 124
        %v1377 = vpop.permute.xlu0 %1376
        %v1379 = vmax.f32 %v1374, %v1377
        %1380 = vrot.lane.b32.xlu0 %v1374, 120
        %v1381 = vpop.permute.xlu0 %1380
        %v1383 = vmax.f32 %v1379, %v1381
        %1384 = vrot.lane.b32.xlu0 %v1374, 116
        %v1385 = vpop.permute.xlu0 %1384
        %v1387 = vmax.f32 %v1383, %v1385
        %v1388 = vsub.f32 %v1374, %v1387
        %v1389 = vmul.f32 %v1388, 1.442695
        %v1390 = vpow.pop %v1389
        %1392 = vrot.lane.b32.xlu0 %v1387, 4
        %v1393 = vpop.permute.xlu0 %1392
        %v1395 = vsub.f32 %v1374, %v1393
        %v1396 = vmul.f32 %v1395, 1.442695
        %v1397 = vpow.pop %v1396
        %1398 = vrot.lane.b32.xlu0 %v1387, 8
        %v1399 = vpop.permute.xlu0 %1398
        %v1401 = vsub.f32 %v1374, %v1399
        %v1402 = vmul.f32 %v1401, 1.442695
        %v1403 = vpow.pop %v1402
        %1404 = vrot.lane.b32.xlu0 %v1387, 12
        %v1405 = vpop.permute.xlu0 %1404
        %v1407 = vsub.f32 %v1374, %v1405
        %v1408 = vmul.f32 %v1407, 1.442695
        %v1409 = vpow.pop %v1408
        %1411 = vrot.lane.b32.xlu0 %v1397, 124
        %v1412 = vpop.permute.xlu0 %1411
        %v1414 = vadd.f32 %v1390, %v1412
        %1416 = vrot.lane.b32.xlu0 %v1403, 120
        %v1417 = vpop.permute.xlu0 %1416
        %v1419 = vadd.f32 %v1414, %v1417
        %1421 = vrot.lane.b32.xlu0 %v1409, 116
        %v1422 = vpop.permute.xlu0 %1421
        %v1424 = vadd.f32 %v1419, %v1422
        %v1425 = vrcp.pop %v1424
        %v1426 = vmul.f32 %v1390, %v1425
        %1428 = vrot.lane.b32.xlu0 %v1425, 4
        %v1429 = vpop.permute.xlu0 %1428
        %v1431 = vmul.f32 %v1397, %v1429
        %1432 = vrot.lane.b32.xlu0 %v1425, 8
        %v1433 = vpop.permute.xlu0 %1432
        %v1435 = vmul.f32 %v1403, %v1433
        %1436 = vrot.lane.b32.xlu0 %v1425, 12
        %v1437 = vpop.permute.xlu0 %1436
        %v1439 = vmul.f32 %v1409, %v1437
        %v1440 = vsel %vm286, %v1426, %v1431
        %v1441 = vsel %vm288, %v1440, %v1435
        %v1442 = vsel %vm290, %v1441, %v1439
        %v1443 = vsel %vm286, %v1097, %v1237
        %v1444 = vsel %vm288, %v1443, %v1243
        %v1445 = vsel %vm290, %v1444, %v1249
        %v1446 = vmul.f32 %v1442, %v1445
        %v1448 = vsel %vm292, %v1446, 0
        %1450 = vmatprep.subr.mxu0 0.0
        %1451 = vmatpush1.msra.mxu0 %v224
        %1452 = vmatprep.subr.mxu0 0.0
        %1453 = vmatpush1.msra.mxu0 %v225
        %1454 = vmatprep.subr.mxu0 0.0
        %1455 = vmatpush1.msra.mxu0 0.0
        %1456 = vmatprep.subr.mxu0 0.0
        %1457 = vmatpush1.msra.mxu0 0.0
        %1458 = vmatprep.subr.mxu0 0.0
        %1459 = vmatpush1.msra.mxu0 0.0
        %1460 = vmatprep.subr.mxu0 0.0
        %1461 = vmatpush1.msra.mxu0 0.0
        %1462 = vmatprep.subr.mxu0 0.0
        %1463 = vmatpush1.msra.mxu0 0.0
        %1464 = vmatprep.subr.mxu0 0.0
        %1465 = vmatpush1.msra.mxu0 0.0
        %1466 = vmatprep.subr.mxu0 0.0
        %1467 = vmatpush1.msra.mxu0 0.0
        %1468 = vmatprep.subr.mxu0 0.0
        %1469 = vmatpush1.msra.mxu0 0.0
        %1470 = vmatprep.subr.mxu0 0.0
        %1471 = vmatpush1.msra.mxu0 0.0
        %1472 = vmatprep.subr.mxu0 0.0
        %1473 = vmatpush1.msra.mxu0 0.0
        %1474 = vmatprep.subr.mxu0 0.0
        %1475 = vmatpush1.msra.mxu0 0.0
        %1476 = vmatprep.subr.mxu0 0.0
        %1477 = vmatpush1.msra.mxu0 0.0
        %1478 = vmatprep.subr.mxu0 0.0
        %1479 = vmatpush1.msra.mxu0 0.0
        %1480 = vmatprep.subr.mxu0 0.0
        %1481 = vmatpush1.msra.mxu0 0.0
        %1482 = vmatprep.subr.mxu0 0.0
        %1483 = vmatpush1.msra.mxu0 0.0
        %1484 = vmatprep.subr.mxu0 0.0
        %1485 = vmatpush1.msra.mxu0 0.0
        %1486 = vmatprep.subr.mxu0 0.0
        %1487 = vmatpush1.msra.mxu0 0.0
        %1488 = vmatprep.subr.mxu0 0.0
        %1489 = vmatpush1.msra.mxu0 0.0
        %1490 = vmatprep.subr.mxu0 0.0
        %1491 = vmatpush1.msra.mxu0 0.0
        %1492 = vmatprep.subr.mxu0 0.0
        %1493 = vmatpush1.msra.mxu0 0.0
        %1494 = vmatprep.subr.mxu0 0.0
        %1495 = vmatpush1.msra.mxu0 0.0
        %1496 = vmatprep.subr.mxu0 0.0
        %1497 = vmatpush1.msra.mxu0 0.0
        %1498 = vmatprep.subr.mxu0 0.0
        %1499 = vmatpush1.msra.mxu0 0.0
        %1500 = vmatprep.subr.mxu0 0.0
        %1501 = vmatpush1.msra.mxu0 0.0
        %1502 = vmatprep.subr.mxu0 0.0
        %1503 = vmatpush1.msra.mxu0 0.0
        %1504 = vmatprep.subr.mxu0 0.0
        %1505 = vmatpush1.msra.mxu0 0.0
        %1506 = vmatprep.subr.mxu0 0.0
        %1507 = vmatpush1.msra.mxu0 0.0
        %1508 = vmatprep.subr.mxu0 0.0
        %1509 = vmatpush1.msra.mxu0 0.0
        %1510 = vmatprep.subr.mxu0 0.0
        %1511 = vmatpush1.msra.mxu0 0.0
        %1512 = vmatprep.subr.mxu0 0.0
        %1513 = vmatpush1.msra.mxu0 0.0
        %1514 = vmatprep.mubr.f32.mxu0 0.0
        %1515 = vmatmul.mubr.f32.gmra.mrb[0].mxu0 %v1448
        %v1516 = vpop.f32.mrb[0].mxu0
        %v1517 = vadd.f32 0.0, %v1516
        %v1518 = vpop.f32.mrb[0].mxu0
        %1519 = vdwg.mxu0
        %s1520 = scalar_lea.vmem %s181, 4 [#allocation7]
        %1521 = vst.msk [vmem:[%s1520] sm:$0x3] %vm229, %v1517
        %s1522 = scalar_lea.vmem %s163, 6 [#allocation4]
        %v1523 = vld [vmem:[%s1522] sm:$0x3]
        %v1524 = vmul.f32 %v1523, 1000.0
        %v1525 = vsel %vm229, %v1524, -inf
        %1526 = vmax.xlane.f32.xlu0 %v1525
        %v1527 = vpop.xlane.xlu0 %1526
        %v1528 = vsub.f32 %v1524, %v1527
        %v1529 = vmul.f32 %v1528, 1.442695
        %v1530 = vpow.pop %v1529
        %v1531 = vsel %vm229, %v1530, 0.0
        %1532 = vadd.xlane.f32.xlu0 %v1531
        %v1533 = vpop.xlane.xlu0 %1532
        %v1534 = vrcp.pop %v1533
        %v1535 = vmul.f32 %v1530, %v1534
        %v1536 = vsub.f32 0.0, %v1524
        %v1537 = vsel %vm229, %v1536, -inf
        %1538 = vmax.xlane.f32.xlu0 %v1537
        %v1539 = vpop.xlane.xlu0 %1538
        %v1540 = vsub.f32 %v1536, %v1539
        %v1541 = vmul.f32 %v1540, 1.442695
        %v1542 = vpow.pop %v1541
        %v1543 = vsel %vm229, %v1542, 0.0
        %1544 = vadd.xlane.f32.xlu0 %v1543
        %v1545 = vpop.xlane.xlu0 %1544
        %v1546 = vrcp.pop %v1545
        %v1547 = vmul.f32 %v1542, %v1546
        %1549 = vset.pattern.permute.xlu0 0
        %1550 = vperm.xlu0 %1549, %v1547
        %v1551 = vpop.permute.xlu0 %1550
        %v1553 = vmul.f32 %v1551, %v1535
        %1554 = vset.pattern.permute.xlu0 1
        %1555 = vperm.xlu0 %1554, %v1547
        %v1556 = vpop.permute.xlu0 %1555
        %v1558 = vmul.f32 %v1556, %v1535
        %1559 = vset.pattern.permute.xlu0 2
        %1560 = vperm.xlu0 %1559, %v1547
        %v1561 = vpop.permute.xlu0 %1560
        %v1563 = vmul.f32 %v1561, %v1535
        %1564 = vset.pattern.permute.xlu0 3
        %1565 = vperm.xlu0 %1564, %v1547
        %v1566 = vpop.permute.xlu0 %1565
        %v1568 = vmul.f32 %v1566, %v1535
        %1570 = vrot.lane.b32.xlu0 %v1558, 4
        %v1571 = vpop.permute.xlu0 %1570
        %1574 = vrot.lane.b32.xlu0 %v1563, 8
        %v1575 = vpop.permute.xlu0 %1574
        %1578 = vrot.lane.b32.xlu0 %v1568, 12
        %v1579 = vpop.permute.xlu0 %1578
        %v1581 = vsel %vm286, %v1553, %v1571
        %v1582 = vsel %vm288, %v1581, %v1575
        %v1583 = vsel %vm290, %v1582, %v1579
        %v1585 = vsel %vm292, %v1583, 0
        %1587 = vmatprep.subr.mxu0 0.0
        %1588 = vmatpush1.msra.mxu0 %v206
        %1589 = vmatprep.subr.mxu0 0.0
        %1590 = vmatpush1.msra.mxu0 %v207
        %1591 = vmatprep.subr.mxu0 0.0
        %1592 = vmatpush1.msra.mxu0 0.0
        %1593 = vmatprep.subr.mxu0 0.0
        %1594 = vmatpush1.msra.mxu0 0.0
        %1595 = vmatprep.subr.mxu0 0.0
        %1596 = vmatpush1.msra.mxu0 0.0
        %1597 = vmatprep.subr.mxu0 0.0
        %1598 = vmatpush1.msra.mxu0 0.0
        %1599 = vmatprep.subr.mxu0 0.0
        %1600 = vmatpush1.msra.mxu0 0.0
        %1601 = vmatprep.subr.mxu0 0.0
        %1602 = vmatpush1.msra.mxu0 0.0
        %1603 = vmatprep.subr.mxu0 0.0
        %1604 = vmatpush1.msra.mxu0 0.0
        %1605 = vmatprep.subr.mxu0 0.0
        %1606 = vmatpush1.msra.mxu0 0.0
        %1607 = vmatprep.subr.mxu0 0.0
        %1608 = vmatpush1.msra.mxu0 0.0
        %1609 = vmatprep.subr.mxu0 0.0
        %1610 = vmatpush1.msra.mxu0 0.0
        %1611 = vmatprep.subr.mxu0 0.0
        %1612 = vmatpush1.msra.mxu0 0.0
        %1613 = vmatprep.subr.mxu0 0.0
        %1614 = vmatpush1.msra.mxu0 0.0
        %1615 = vmatprep.subr.mxu0 0.0
        %1616 = vmatpush1.msra.mxu0 0.0
        %1617 = vmatprep.subr.mxu0 0.0
        %1618 = vmatpush1.msra.mxu0 0.0
        %1619 = vmatprep.subr.mxu0 0.0
        %1620 = vmatpush1.msra.mxu0 0.0
        %1621 = vmatprep.subr.mxu0 0.0
        %1622 = vmatpush1.msra.mxu0 0.0
        %1623 = vmatprep.subr.mxu0 0.0
        %1624 = vmatpush1.msra.mxu0 0.0
        %1625 = vmatprep.subr.mxu0 0.0
        %1626 = vmatpush1.msra.mxu0 0.0
        %1627 = vmatprep.subr.mxu0 0.0
        %1628 = vmatpush1.msra.mxu0 0.0
        %1629 = vmatprep.subr.mxu0 0.0
        %1630 = vmatpush1.msra.mxu0 0.0
        %1631 = vmatprep.subr.mxu0 0.0
        %1632 = vmatpush1.msra.mxu0 0.0
        %1633 = vmatprep.subr.mxu0 0.0
        %1634 = vmatpush1.msra.mxu0 0.0
        %1635 = vmatprep.subr.mxu0 0.0
        %1636 = vmatpush1.msra.mxu0 0.0
        %1637 = vmatprep.subr.mxu0 0.0
        %1638 = vmatpush1.msra.mxu0 0.0
        %1639 = vmatprep.subr.mxu0 0.0
        %1640 = vmatpush1.msra.mxu0 0.0
        %1641 = vmatprep.subr.mxu0 0.0
        %1642 = vmatpush1.msra.mxu0 0.0
        %1643 = vmatprep.subr.mxu0 0.0
        %1644 = vmatpush1.msra.mxu0 0.0
        %1645 = vmatprep.subr.mxu0 0.0
        %1646 = vmatpush1.msra.mxu0 0.0
        %1647 = vmatprep.subr.mxu0 0.0
        %1648 = vmatpush1.msra.mxu0 0.0
        %1649 = vmatprep.subr.mxu0 0.0
        %1650 = vmatpush1.msra.mxu0 0.0
        %1651 = vmatprep.mubr.f32.mxu0 0.0
        %1652 = vmatmul.mubr.f32.gmra.mrb[0].mxu0 %v1585
        %v1653 = vpop.f32.mrb[0].mxu0
        %v1654 = vadd.f32 0.0, %v1653
        %v1655 = vpop.f32.mrb[0].mxu0
        %1656 = vdwg.mxu0
        %1658 = vrot.lane.b32.xlu0 %v1442, 1
        %v1659 = vpop.permute.xlu0 %1658
        %1662 = vrot.lane.b32.xlu0 %v1523, 4
        %v1663 = vpop.permute.xlu0 %1662
        %1665 = vrot.lane.b32.xlu0 %v1442, 2
        %v1666 = vpop.permute.xlu0 %1665
        %1668 = vrot.lane.b32.xlu0 %v1523, 8
        %v1669 = vpop.permute.xlu0 %1668
        %1671 = vrot.lane.b32.xlu0 %v1442, 3
        %v1672 = vpop.permute.xlu0 %1671
        %1674 = vrot.lane.b32.xlu0 %v1523, 12
        %v1675 = vpop.permute.xlu0 %1674
        %1677 = vrot.lane.b32.xlu0 %v1442, 4
        %v1678 = vpop.permute.xlu0 %1677
        %v1680 = vsel %vm389, %v1523, %v1659
        %v1681 = vsel %vm391, %v1680, %v1663
        %v1682 = vsel %vm393, %v1681, %v1666
        %v1683 = vsel %vm395, %v1682, %v1669
        %v1684 = vsel %vm397, %v1683, %v1672
        %v1685 = vsel %vm399, %v1684, %v1675
        %v1686 = vsel %vm292, %v1685, %v1678
        %v1687 = vmul.f32 %v1686, %v1654
        %1689 = vrot.lane.b32.xlu0 %v1687, 123
        %v1690 = vpop.permute.xlu0 %1689
        %v1692 = vadd.f32 %v1687, %v1690
        %1693 = vrot.lane.b32.xlu0 %v1687, 118
        %v1694 = vpop.permute.xlu0 %1693
        %v1696 = vadd.f32 %v1692, %v1694
        %1697 = vrot.lane.b32.xlu0 %v1687, 113
        %v1698 = vpop.permute.xlu0 %1697
        %v1700 = vadd.f32 %v1696, %v1698
        %v1701 = vmul.f32 %v1700, 1000.0
        %v1702 = vsel %vm417, %v1701, -inf
        %1703 = vmax.xlane.f32.xlu0 %v1702
        %v1704 = vpop.xlane.xlu0 %1703
        %v1705 = vsub.f32 %v1701, %v1704
        %v1706 = vmul.f32 %v1705, 1.442695
        %v1707 = vpow.pop %v1706
        %v1708 = vsel %vm417, %v1707, 0.0
        %1709 = vadd.xlane.f32.xlu0 %v1708
        %v1710 = vpop.xlane.xlu0 %1709
        %v1711 = vrcp.pop %v1710
        %v1712 = vmul.f32 %v1707, %v1711
        %1714 = vrot.lane.b32.xlu0 %v1712, 5
        %v1715 = vpop.permute.xlu0 %1714
        %1717 = vrot.lane.b32.xlu0 %v1712, 10
        %v1718 = vpop.permute.xlu0 %1717
        %1720 = vrot.lane.b32.xlu0 %v1712, 15
        %v1721 = vpop.permute.xlu0 %1720
        %v1723 = vsel %vm391, %v1712, %v1715
        %v1724 = vsel %vm395, %v1723, %v1718
        %v1725 = vsel %vm399, %v1724, %v1721
        %v1726 = vmul.f32 %v1686, %v1725
        %v1728 = vsel %vm443, %v1726, 0
        %1730 = vmatprep.subr.mxu0 0.0
        %1731 = vmatpush1.xpose.msra.mxu0 %v448
        %1732 = vmatprep.subr.mxu0 0.0
        %1733 = vmatpush1.xpose.msra.mxu0 %v451
        %1734 = vmatprep.subr.mxu0 0.0
        %1735 = vmatpush1.xpose.msra.mxu0 0.0
        %1736 = vmatprep.subr.mxu0 0.0
        %1737 = vmatpush1.xpose.msra.mxu0 0.0
        %1738 = vmatprep.subr.mxu0 0.0
        %1739 = vmatpush1.xpose.msra.mxu0 0.0
        %1740 = vmatprep.subr.mxu0 0.0
        %1741 = vmatpush1.xpose.msra.mxu0 0.0
        %1742 = vmatprep.subr.mxu0 0.0
        %1743 = vmatpush1.xpose.msra.mxu0 0.0
        %1744 = vmatprep.subr.mxu0 0.0
        %1745 = vmatpush1.xpose.msra.mxu0 0.0
        %1746 = vmatprep.subr.mxu0 0.0
        %1747 = vmatpush1.xpose.msra.mxu0 0.0
        %1748 = vmatprep.subr.mxu0 0.0
        %1749 = vmatpush1.xpose.msra.mxu0 0.0
        %1750 = vmatprep.subr.mxu0 0.0
        %1751 = vmatpush1.xpose.msra.mxu0 0.0
        %1752 = vmatprep.subr.mxu0 0.0
        %1753 = vmatpush1.xpose.msra.mxu0 0.0
        %1754 = vmatprep.subr.mxu0 0.0
        %1755 = vmatpush1.xpose.msra.mxu0 0.0
        %1756 = vmatprep.subr.mxu0 0.0
        %1757 = vmatpush1.xpose.msra.mxu0 0.0
        %1758 = vmatprep.subr.mxu0 0.0
        %1759 = vmatpush1.xpose.msra.mxu0 0.0
        %1760 = vmatprep.subr.mxu0 0.0
        %1761 = vmatpush1.xpose.msra.mxu0 0.0
        %1762 = vmatprep.subr.mxu0 0.0
        %1763 = vmatpush1.xpose.msra.mxu0 0.0
        %1764 = vmatprep.subr.mxu0 0.0
        %1765 = vmatpush1.xpose.msra.mxu0 0.0
        %1766 = vmatprep.subr.mxu0 0.0
        %1767 = vmatpush1.xpose.msra.mxu0 0.0
        %1768 = vmatprep.subr.mxu0 0.0
        %1769 = vmatpush1.xpose.msra.mxu0 0.0
        %1770 = vmatprep.subr.mxu0 0.0
        %1771 = vmatpush1.xpose.msra.mxu0 0.0
        %1772 = vmatprep.subr.mxu0 0.0
        %1773 = vmatpush1.xpose.msra.mxu0 0.0
        %1774 = vmatprep.subr.mxu0 0.0
        %1775 = vmatpush1.xpose.msra.mxu0 0.0
        %1776 = vmatprep.subr.mxu0 0.0
        %1777 = vmatpush1.xpose.msra.mxu0 0.0
        %1778 = vmatprep.subr.mxu0 0.0
        %1779 = vmatpush1.xpose.msra.mxu0 0.0
        %1780 = vmatprep.subr.mxu0 0.0
        %1781 = vmatpush1.xpose.msra.mxu0 0.0
        %1782 = vmatprep.subr.mxu0 0.0
        %1783 = vmatpush1.xpose.msra.mxu0 0.0
        %1784 = vmatprep.subr.mxu0 0.0
        %1785 = vmatpush1.xpose.msra.mxu0 0.0
        %1786 = vmatprep.subr.mxu0 0.0
        %1787 = vmatpush1.xpose.msra.mxu0 0.0
        %1788 = vmatprep.subr.mxu0 0.0
        %1789 = vmatpush1.xpose.msra.mxu0 0.0
        %1790 = vmatprep.subr.mxu0 0.0
        %1791 = vmatpush1.xpose.msra.mxu0 0.0
        %1792 = vmatprep.subr.mxu0 0.0
        %1793 = vmatpush1.xpose.msra.mxu0 0.0
        %1794 = vmatprep.mubr.f32.mxu0 0.0
        %1795 = vmatmul.mubr.f32.gmra.mrb[0].mxu0 %v1728
        %v1796 = vpop.f32.mrb[0].mxu0
        %v1797 = vadd.f32 0.0, %v1796
        %v1798 = vpop.f32.mrb[0].mxu0
        %1799 = vdwg.mxu0
        %v1800 = vmul.f32 %v1797, 7.0
        %1802 = vrot.lane.b32.xlu0 %v1800, 124
        %v1803 = vpop.permute.xlu0 %1802
        %v1805 = vmax.f32 %v1800, %v1803
        %1806 = vrot.lane.b32.xlu0 %v1800, 120
        %v1807 = vpop.permute.xlu0 %1806
        %v1809 = vmax.f32 %v1805, %v1807
        %1810 = vrot.lane.b32.xlu0 %v1800, 116
        %v1811 = vpop.permute.xlu0 %1810
        %v1813 = vmax.f32 %v1809, %v1811
        %v1814 = vsub.f32 %v1800, %v1813
        %v1815 = vmul.f32 %v1814, 1.442695
        %v1816 = vpow.pop %v1815
        %1818 = vrot.lane.b32.xlu0 %v1813, 4
        %v1819 = vpop.permute.xlu0 %1818
        %v1821 = vsub.f32 %v1800, %v1819
        %v1822 = vmul.f32 %v1821, 1.442695
        %v1823 = vpow.pop %v1822
        %1824 = vrot.lane.b32.xlu0 %v1813, 8
        %v1825 = vpop.permute.xlu0 %1824
        %v1827 = vsub.f32 %v1800, %v1825
        %v1828 = vmul.f32 %v1827, 1.442695
        %v1829 = vpow.pop %v1828
        %1830 = vrot.lane.b32.xlu0 %v1813, 12
        %v1831 = vpop.permute.xlu0 %1830
        %v1833 = vsub.f32 %v1800, %v1831
        %v1834 = vmul.f32 %v1833, 1.442695
        %v1835 = vpow.pop %v1834
        %1837 = vrot.lane.b32.xlu0 %v1823, 124
        %v1838 = vpop.permute.xlu0 %1837
        %v1840 = vadd.f32 %v1816, %v1838
        %1842 = vrot.lane.b32.xlu0 %v1829, 120
        %v1843 = vpop.permute.xlu0 %1842
        %v1845 = vadd.f32 %v1840, %v1843
        %1847 = vrot.lane.b32.xlu0 %v1835, 116
        %v1848 = vpop.permute.xlu0 %1847
        %v1850 = vadd.f32 %v1845, %v1848
        %v1851 = vrcp.pop %v1850
        %v1852 = vmul.f32 %v1816, %v1851
        %1854 = vrot.lane.b32.xlu0 %v1851, 4
        %v1855 = vpop.permute.xlu0 %1854
        %v1857 = vmul.f32 %v1823, %v1855
        %1858 = vrot.lane.b32.xlu0 %v1851, 8
        %v1859 = vpop.permute.xlu0 %1858
        %v1861 = vmul.f32 %v1829, %v1859
        %1862 = vrot.lane.b32.xlu0 %v1851, 12
        %v1863 = vpop.permute.xlu0 %1862
        %v1865 = vmul.f32 %v1835, %v1863
        %v1866 = vsel %vm286, %v1852, %v1857
        %v1867 = vsel %vm288, %v1866, %v1861
        %v1868 = vsel %vm290, %v1867, %v1865
        %v1869 = vsel %vm286, %v1523, %v1663
        %v1870 = vsel %vm288, %v1869, %v1669
        %v1871 = vsel %vm290, %v1870, %v1675
        %v1872 = vmul.f32 %v1868, %v1871
        %v1874 = vsel %vm292, %v1872, 0
        %1876 = vmatprep.subr.mxu0 0.0
        %1877 = vmatpush1.msra.mxu0 %v224
        %1878 = vmatprep.subr.mxu0 0.0
        %1879 = vmatpush1.msra.mxu0 %v225
        %1880 = vmatprep.subr.mxu0 0.0
        %1881 = vmatpush1.msra.mxu0 0.0
        %1882 = vmatprep.subr.mxu0 0.0
        %1883 = vmatpush1.msra.mxu0 0.0
        %1884 = vmatprep.subr.mxu0 0.0
        %1885 = vmatpush1.msra.mxu0 0.0
        %1886 = vmatprep.subr.mxu0 0.0
        %1887 = vmatpush1.msra.mxu0 0.0
        %1888 = vmatprep.subr.mxu0 0.0
        %1889 = vmatpush1.msra.mxu0 0.0
        %1890 = vmatprep.subr.mxu0 0.0
        %1891 = vmatpush1.msra.mxu0 0.0
        %1892 = vmatprep.subr.mxu0 0.0
        %1893 = vmatpush1.msra.mxu0 0.0
        %1894 = vmatprep.subr.mxu0 0.0
        %1895 = vmatpush1.msra.mxu0 0.0
        %1896 = vmatprep.subr.mxu0 0.0
        %1897 = vmatpush1.msra.mxu0 0.0
        %1898 = vmatprep.subr.mxu0 0.0
        %1899 = vmatpush1.msra.mxu0 0.0
        %1900 = vmatprep.subr.mxu0 0.0
        %1901 = vmatpush1.msra.mxu0 0.0
        %1902 = vmatprep.subr.mxu0 0.0
        %1903 = vmatpush1.msra.mxu0 0.0
        %1904 = vmatprep.subr.mxu0 0.0
        %1905 = vmatpush1.msra.mxu0 0.0
        %1906 = vmatprep.subr.mxu0 0.0
        %1907 = vmatpush1.msra.mxu0 0.0
        %1908 = vmatprep.subr.mxu0 0.0
        %1909 = vmatpush1.msra.mxu0 0.0
        %1910 = vmatprep.subr.mxu0 0.0
        %1911 = vmatpush1.msra.mxu0 0.0
        %1912 = vmatprep.subr.mxu0 0.0
        %1913 = vmatpush1.msra.mxu0 0.0
        %1914 = vmatprep.subr.mxu0 0.0
        %1915 = vmatpush1.msra.mxu0 0.0
        %1916 = vmatprep.subr.mxu0 0.0
        %1917 = vmatpush1.msra.mxu0 0.0
        %1918 = vmatprep.subr.mxu0 0.0
        %1919 = vmatpush1.msra.mxu0 0.0
        %1920 = vmatprep.subr.mxu0 0.0
        %1921 = vmatpush1.msra.mxu0 0.0
        %1922 = vmatprep.subr.mxu0 0.0
        %1923 = vmatpush1.msra.mxu0 0.0
        %1924 = vmatprep.subr.mxu0 0.0
        %1925 = vmatpush1.msra.mxu0 0.0
        %1926 = vmatprep.subr.mxu0 0.0
        %1927 = vmatpush1.msra.mxu0 0.0
        %1928 = vmatprep.subr.mxu0 0.0
        %1929 = vmatpush1.msra.mxu0 0.0
        %1930 = vmatprep.subr.mxu0 0.0
        %1931 = vmatpush1.msra.mxu0 0.0
        %1932 = vmatprep.subr.mxu0 0.0
        %1933 = vmatpush1.msra.mxu0 0.0
        %1934 = vmatprep.subr.mxu0 0.0
        %1935 = vmatpush1.msra.mxu0 0.0
        %1936 = vmatprep.subr.mxu0 0.0
        %1937 = vmatpush1.msra.mxu0 0.0
        %1938 = vmatprep.subr.mxu0 0.0
        %1939 = vmatpush1.msra.mxu0 0.0
        %1940 = vmatprep.mubr.f32.mxu0 0.0
        %1941 = vmatmul.mubr.f32.gmra.mrb[0].mxu0 %v1874
        %v1942 = vpop.f32.mrb[0].mxu0
        %v1943 = vadd.f32 0.0, %v1942
        %v1944 = vpop.f32.mrb[0].mxu0
        %1945 = vdwg.mxu0
        %s1946 = scalar_lea.vmem %s181, 6 [#allocation7]
        %1947 = vst.msk [vmem:[%s1946] sm:$0x3] %vm229, %v1943
        %vm1948 = vcmask 123904
        %1949 = vst.msk [vmem:[#allocation8] sm:$0x3] %vm1948, %v1868
        %s1950 = sand.u32 %s72, 1
        %s1951 = scalar_lea.sflag [#allocation6], %s1950
        %s1952 = sand.u32 %s72, 1
        %s1953 = smul.addr %s1952, 8
        %s1954 = scalar_lea.vmem [#allocation7], %s1953
        // Predicated region
        $region37: #{tpu_custom_call.1} parent=23 // pred_check
          %p1955 = pneg %p82
        $region38: #{tpu_custom_call.1} parent=23 // pred_check_branch
          %1957 = sbr.rel (%p1955) target = $region40
        $region39: #{tpu_custom_call.1} parent=23 // pred_region
          %s1958 = smul.u32 4, %s27
          %s1960 = ssub.s32 128, 128
          %1961 = vsyncadd %s1951, %s1960
          %s1962 = sadd.s32 %s26, %s1958
          %s1963 = smul.addr %s1962, 32
          %s1964 = scalar_lea.hbm %s2, %s1963
          %s1965 = sshll.u32 %s1954, 4
          %s1966 = int_to_ptr.vmem [resolvable:$true] %s1965
          %1971 = dma.vmem_to_hbm [thread:$0]  %s1966, 128, %s1964, %s1951, 32, 32, 2
        $region40: #{tpu_custom_call.1} parent=23 // pred_fallthru
          _
        // Predicated region
        $region41: #{tpu_custom_call.1} parent=23 // pred_check
          %p1972 = pneg %p108
        $region42: #{tpu_custom_call.1} parent=23 // pred_check_branch
          %1974 = sbr.rel (%p1972) target = $region44
        $region43: #{tpu_custom_call.1} parent=23 // pred_region
          %s1976 = ssub.s32 32, 32
          %1977 = vsyncadd [#allocation9], %s1976
          %s1978 = smul.addr %s26, 32
          %s1979 = scalar_lea.hbm %s3, %s1978
          %s1981 = sshll.u32 [#allocation8], 4
          %s1982 = int_to_ptr.vmem [resolvable:$true] %s1981
          %1984 = dma.vmem_to_hbm [thread:$0]  %s1982, 32, %s1979, [#allocation9]
        $region44: #{tpu_custom_call.1} parent=23 // pred_fallthru
          _
        // Predicated region
        $region45: #{tpu_custom_call.1} parent=23 // pred_check
          %p1985 = pneg %p108
        $region46: #{tpu_custom_call.1} parent=23 // pred_check_branch
          %1987 = sbr.rel (%p1985) target = $region48
        $region47: #{tpu_custom_call.1} parent=23 // pred_region
          %1988 = dma.done [#allocation9], 32
        $region48: #{tpu_custom_call.1} parent=23 // pred_fallthru
          _
      $region24: #{tpu_custom_call.1} parent=5 // pred_fallthru
        _
      %p1989 = scmp.le.s32.totalorder 2, %s17
      // Predicated region
      $region49: #{tpu_custom_call.1} parent=5 // pred_check
        %p1990 = pneg %p1989
      $region50: #{tpu_custom_call.1} parent=5 // pred_check_branch
        %1992 = sbr.rel (%p1990) target = $region52
      $region51: #{tpu_custom_call.1} parent=5 // pred_region
        %s1993 = ssub.s32 %s17, 2
        // Predicated region
        $region53: #{tpu_custom_call.1} parent=51 // pred_check
          %p1994 = pneg %p88
        $region54: #{tpu_custom_call.1} parent=51 // pred_check_branch
          %1996 = sbr.rel (%p1994) target = $region56
        $region55: #{tpu_custom_call.1} parent=51 // pred_region
          %s1997 = sand.u32 %s73, 1
          %s1998 = scalar_lea.sflag [#allocation6], %s1997
          %s1999 = sand.u32 %s73, 1
          %s2000 = smul.addr %s1999, 8
          %s2001 = scalar_lea.vmem [#allocation7], %s2000
          %2002 = dma.done %s1998, 128
        $region56: #{tpu_custom_call.1} parent=51 // pred_fallthru
          _
      $region52: #{tpu_custom_call.1} parent=5 // pred_fallthru
        _
    $region6: #{tpu_custom_call.1} parent=1 // loop_footer
      %s21 = sadd.s32 1, %s17
    $region7: #{tpu_custom_call.1} parent=1 // loop_footer_branch
      %16 = sbr.rel target = $region3
    $region8: #{tpu_custom_call.1} parent=1 // loop_exit
      _
    %2003 = vsyncpa [#allocation5], 1
    %s2004 = scalar_lea.sflag [#allocation5], 1
    %2005 = vsyncpa %s2004, 1
    %2006 = vsyncpa [#allocation6], 1
    %s2007 = scalar_lea.sflag [#allocation6], 1
    %2008 = vsyncpa %s2007, 1
    %2009 = vsyncpa [#allocation9], 1
  %2010 = vsyncmov [#allocation3]
  %s2011 = vpop.sfrf %2010
  %p2012 = scmp.eq.s32.totalorder %s2011, 0
  %p2013 = pneg %p2012
  %2015 = shalt.err (%p2013)

</llo_original>
